<compile_context>
chip_gen: v7x
topology: tpu7x:2x2x1
jax: 0.10.0
libtpu: 0.0.40
codegen_flags: <defaults>
</compile_context>

<pallas_src>
from functools import partial

import numpy as np
import jax
import jax.numpy as jnp
from jax import lax
from jax.experimental import pallas as pl
from jax.experimental.pallas import tpu as pltpu


# ---------------------------------------------------------------------------
# Fused kernel: whole batch, all heads, causal softmax, output Linear
# ---------------------------------------------------------------------------
def _mha_fused_kernel(x_ref, wqkv_ref, wo_ref, b_ref, o_ref, *,
                      num_heads, head_size):
    # x_ref    : (B, T, C)  activations, C = num_heads * head_size (lane-dense)
    # wqkv_ref : (C, 3C)    fused block-diagonal QKV weight (scale folded into Q)
    # wo_ref   : (C, C)     output Linear weight (transposed), b_ref: (1, C) bias
    C = num_heads * head_size
    B, T, _ = x_ref.shape

    wqkv = wqkv_ref[...]
    wo = wo_ref[...]
    bias = b_ref[...]

    # Causal (tril) mask, built once and reused by every batch element / head.
    row = lax.broadcasted_iota(jnp.int32, (T, T), 0)
    col = lax.broadcasted_iota(jnp.int32, (T, T), 1)
    causal = col <= row

    for b in range(B):                      # B tiny: static unroll, no grid steps
        x = x_ref[b].astype(jnp.float32)                                # (T, C)

        # One lane-dense MXU matmul (K = C = 128) for all heads' Q, K, V.
        qkv = jnp.dot(x, wqkv, preferred_element_type=jnp.float32)      # (T, 3C)
        q_all = qkv[:, :C]
        k_all = qkv[:, C:2 * C]
        v_all = qkv[:, 2 * C:]

        head_outs = []
        for h in range(num_heads):
            lo = h * head_size
            hi = lo + head_size
            q = q_all[:, lo:hi]
            k = k_all[:, lo:hi]
            v = v_all[:, lo:hi]

            # q @ k^T without materializing k.T; scale already folded into Wq.
            scores = lax.dot_general(q, k, (((1,), (1,)), ((), ())),
                                     preferred_element_type=jnp.float32)
            scores = jnp.where(causal, scores, -jnp.inf)   # diagonal always kept

            m = jnp.max(scores, axis=-1, keepdims=True)
            e = jnp.exp(scores - m)
            s = jnp.sum(e, axis=-1, keepdims=True)
            p = e * pl.reciprocal(s, approx=False)         # exact: 1e-4 tolerance
            # TODO(synk): nn.Dropout on attention weights is identity (eval mode).

            head_outs.append(jnp.dot(p, v, preferred_element_type=jnp.float32))

        # Lane-concatenate heads -> single fused output projection (K = 128).
        cat = jnp.concatenate(head_outs, axis=-1)                        # (T, C)
        y = jnp.dot(cat, wo, preferred_element_type=jnp.float32) + bias
        o_ref[b] = y.astype(o_ref.dtype)                 # full 128-lane stores


# ---------------------------------------------------------------------------
# One-time host-side parameter transform (block-diagonal fused QKV, scale fold)
# ---------------------------------------------------------------------------
def prepare_params(wq_t, wk_t, wv_t, w_out_t, b_out):
    H, hs, _ = wq_t.shape
    C = H * hs
    scale = float(hs) ** -0.5        # AttentionHead scales scores by head_size**-0.5

    def block_diag(w):
        bd = jnp.zeros((C, C), w.dtype)
        for h in range(H):
            bd = bd.at[h * hs:(h + 1) * hs, h * hs:(h + 1) * hs].set(w[h])
        return bd

    w_qkv = jnp.concatenate(
        [block_diag(wq_t * scale), block_diag(wk_t), block_diag(wv_t)], axis=1)
    return {"w_qkv": w_qkv, "w_out_t": w_out_t, "b_out": b_out,
            "num_heads": H, "head_size": hs}


# ---------------------------------------------------------------------------
# Wrapper
# ---------------------------------------------------------------------------
def multi_head_attention(toks, params):
    w_qkv, w_out_t, b_out = params["w_qkv"], params["w_out_t"], params["b_out"]
    H, hs = params["num_heads"], params["head_size"]

    B, T, C = toks.shape
    assert C == H * hs

    kernel = partial(_mha_fused_kernel, num_heads=H, head_size=hs)

    return pl.pallas_call(
        kernel,
        out_shape=jax.ShapeDtypeStruct((B, T, C), toks.dtype),
        grid=(1,),                                   # single grid step
        in_specs=[
            pl.BlockSpec((B, T, C), lambda i: (0, 0, 0)),
            pl.BlockSpec((C, 3 * C), lambda i: (0, 0)),
            pl.BlockSpec((C, C), lambda i: (0, 0)),
            pl.BlockSpec((1, C), lambda i: (0, 0)),
        ],
        out_specs=pl.BlockSpec((B, T, C), lambda i: (0, 0, 0)),
        compiler_params=pltpu.CompilerParams(
            dimension_semantics=("arbitrary",)),
    )(toks, w_qkv, w_out_t, b_out.reshape(1, C))


# ---------------------------------------------------------------------------
# Pure-JAX reference (mirrors the PyTorch forward, dropout = identity)
# ---------------------------------------------------------------------------
def reference(toks, wq_t, wk_t, wv_t, w_out_t, b_out):
    B, T, C = toks.shape
    H, hs, _ = wq_t.shape
    outs = []
    tril = jnp.tril(jnp.ones((T, T)))
    for h in range(H):
        xh = toks[:, :, h * hs:(h + 1) * hs]
        q = xh @ wq_t[h]
        k = xh @ wk_t[h]
        v = xh @ wv_t[h]
        w = (q @ jnp.swapaxes(k, -1, -2)) * float(hs) ** -0.5
        w = jnp.where(tril == 0, -jnp.inf, w)
        w = jax.nn.softmax(w, axis=-1)
        outs.append(w @ v)
    cat = jnp.concatenate(outs, axis=-1)
    return cat @ w_out_t + b_out


# ---------------------------------------------------------------------------
# Main
# ---------------------------------------------------------------------------
if __name__ == "__main__":
    B = 2
    num_heads = 4
    head_size = 32
    block_size = 16
    T = 16                       # T <= block_size
    C = num_heads * head_size    # 128

    key = jax.random.PRNGKey(0)
    k_x, k_q, k_k, k_v, k_w, k_b = jax.random.split(key, 6)

    bound_h = 1.0 / np.sqrt(head_size)
    bound_c = 1.0 / np.sqrt(C)

    # per-head projection weights, stored transposed: q = x @ wq_t[h]
    wq_t = jax.random.uniform(k_q, (num_heads, head_size, head_size),
                              jnp.float32, -bound_h, bound_h)
    wk_t = jax.random.uniform(k_k, (num_heads, head_size, head_size),
                              jnp.float32, -bound_h, bound_h)
    wv_t = jax.random.uniform(k_v, (num_heads, head_size, head_size),
                              jnp.float32, -bound_h, bound_h)
    # output Linear (with bias), stored transposed: y = x @ w_out_t + b
    w_out_t = jax.random.uniform(k_w, (C, C), jnp.float32, -bound_c, bound_c)
    b_out = jax.random.uniform(k_b, (C,), jnp.float32, -bound_c, bound_c)

    toks = jax.random.normal(k_x, (B, T, C), jnp.float32)

    params = prepare_params(wq_t, wk_t, wv_t, w_out_t, b_out)

    out = multi_head_attention(toks, params)
    out = jax.block_until_ready(out)

    ref = reference(toks, wq_t, wk_t, wv_t, w_out_t, b_out)
    np.testing.assert_allclose(np.asarray(out), np.asarray(ref),
                               rtol=1e-4, atol=1e-4)

    print("KERNEL_OK")
</pallas_src>

<mosaic_0001>
module attributes {stable_mosaic.version = 11 : i64} {
  func.func @_mha_fused_kernel(%arg0: i32, %arg1: memref<2x16x128xf32, #tpu.memory_space<vmem>>, %arg2: memref<128x384xf32, #tpu.memory_space<vmem>>, %arg3: memref<128x128xf32, #tpu.memory_space<vmem>>, %arg4: memref<1x128xf32, #tpu.memory_space<vmem>>, %arg5: memref<2x16x128xf32, #tpu.memory_space<vmem>>) attributes {dimension_semantics = [#tpu.dimension_semantics<arbitrary>], iteration_bounds = array<i64: 1>, scalar_prefetch = 0 : i64, scratch_operands = 0 : i64, tpu.core_type = #tpu.core_type<tc>, window_params = [{pipeline_mode = #tpu.pipeline_mode<synchronous>, transform_indices = @transform_0, window_bounds = array<i64: 2, 16, 128>}, {pipeline_mode = #tpu.pipeline_mode<synchronous>, transform_indices = @transform_1, window_bounds = array<i64: 128, 384>}, {pipeline_mode = #tpu.pipeline_mode<synchronous>, transform_indices = @transform_2, window_bounds = array<i64: 128, 128>}, {pipeline_mode = #tpu.pipeline_mode<synchronous>, transform_indices = @transform_3, window_bounds = array<i64: 1, 128>}, {pipeline_mode = #tpu.pipeline_mode<synchronous>, transform_indices = @transform_4, window_bounds = array<i64: 2, 16, 128>}]} {
    %c0 = arith.constant 0 : index
    %c0_0 = arith.constant 0 : index
    %0 = vector.load %arg2[%c0, %c0_0] : memref<128x384xf32, #tpu.memory_space<vmem>>, vector<128x384xf32>
    %c0_1 = arith.constant 0 : index
    %c0_2 = arith.constant 0 : index
    %1 = vector.load %arg3[%c0_1, %c0_2] : memref<128x128xf32, #tpu.memory_space<vmem>>, vector<128x128xf32>
    %c0_3 = arith.constant 0 : index
    %c0_4 = arith.constant 0 : index
    %2 = vector.load %arg4[%c0_3, %c0_4] : memref<1x128xf32, #tpu.memory_space<vmem>>, vector<1x128xf32>
    %3 = tpu.iota {dimensions = array<i32: 0>} : vector<16x16xi32>
    %4 = tpu.iota {dimensions = array<i32: 1>} : vector<16x16xi32>
    %5 = arith.cmpi sle, %4, %3 : vector<16x16xi32>
    %c0_5 = arith.constant 0 : index
    %c0_6 = arith.constant 0 : index
    %c0_7 = arith.constant 0 : index
    %6 = vector.load %arg1[%c0_5, %c0_6, %c0_7] : memref<2x16x128xf32, #tpu.memory_space<vmem>>, vector<1x16x128xf32>
    %7 = vector.shape_cast %6 : vector<1x16x128xf32> to vector<16x128xf32>
    %cst = arith.constant dense<0.000000e+00> : vector<16x384xf32>
    %8 = tpu.matmul %7, %0, %cst {dimension_numbers = #tpu.dot_dimension_numbers<[1], [0], [0], [1], [0, 0, 1, 1], [], []>} : vector<16x128xf32>, vector<128x384xf32>, vector<16x384xf32> -> vector<16x384xf32>
    %9 = vector.extract_strided_slice %8 {offsets = [0, 0], sizes = [16, 128], strides = [1, 1]} : vector<16x384xf32> to vector<16x128xf32>
    %10 = vector.extract_strided_slice %8 {offsets = [0, 128], sizes = [16, 128], strides = [1, 1]} : vector<16x384xf32> to vector<16x128xf32>
    %11 = vector.extract_strided_slice %8 {offsets = [0, 256], sizes = [16, 128], strides = [1, 1]} : vector<16x384xf32> to vector<16x128xf32>
    %12 = vector.extract_strided_slice %9 {offsets = [0, 0], sizes = [16, 32], strides = [1, 1]} : vector<16x128xf32> to vector<16x32xf32>
    %13 = vector.extract_strided_slice %10 {offsets = [0, 0], sizes = [16, 32], strides = [1, 1]} : vector<16x128xf32> to vector<16x32xf32>
    %14 = vector.extract_strided_slice %11 {offsets = [0, 0], sizes = [16, 32], strides = [1, 1]} : vector<16x128xf32> to vector<16x32xf32>
    %cst_8 = arith.constant dense<0.000000e+00> : vector<16x16xf32>
    %15 = tpu.matmul %12, %13, %cst_8 {dimension_numbers = #tpu.dot_dimension_numbers<[1], [1], [0], [0], [0, 0, 1, 0], [], []>} : vector<16x32xf32>, vector<16x32xf32>, vector<16x16xf32> -> vector<16x16xf32>
    %cst_9 = arith.constant 0xFF800000 : f32
    %16 = vector.broadcast %cst_9 : f32 to vector<16x16xf32>
    %17 = arith.select %5, %15, %16 : vector<16x16xi1>, vector<16x16xf32>
    %cst_10 = arith.constant dense<0xFF800000> : vector<16xf32>
    %18 = vector.multi_reduction <maximumf>, %17, %cst_10 [1] : vector<16x16xf32> to vector<16xf32>
    %19 = vector.shape_cast %18 : vector<16xf32> to vector<16x1xf32>
    %20 = vector.broadcast %19 : vector<16x1xf32> to vector<16x16xf32>
    %21 = arith.subf %17, %20 : vector<16x16xf32>
    %22 = math.exp %21 : vector<16x16xf32>
    %cst_11 = arith.constant dense<0.000000e+00> : vector<16xf32>
    %23 = vector.multi_reduction <add>, %22, %cst_11 [1] : vector<16x16xf32> to vector<16xf32>
    %24 = vector.shape_cast %23 : vector<16xf32> to vector<16x1xf32>
    %25 = tpu.reciprocal %24 : vector<16x1xf32> -> vector<16x1xf32>
    %26 = vector.broadcast %25 : vector<16x1xf32> to vector<16x16xf32>
    %27 = arith.mulf %22, %26 : vector<16x16xf32>
    %cst_12 = arith.constant dense<0.000000e+00> : vector<16x32xf32>
    %28 = tpu.matmul %27, %14, %cst_12 {dimension_numbers = #tpu.dot_dimension_numbers<[1], [0], [0], [1], [0, 0, 1, 1], [], []>} : vector<16x16xf32>, vector<16x32xf32>, vector<16x32xf32> -> vector<16x32xf32>
    %29 = vector.extract_strided_slice %9 {offsets = [0, 32], sizes = [16, 32], strides = [1, 1]} : vector<16x128xf32> to vector<16x32xf32>
    %30 = vector.extract_strided_slice %10 {offsets = [0, 32], sizes = [16, 32], strides = [1, 1]} : vector<16x128xf32> to vector<16x32xf32>
    %31 = vector.extract_strided_slice %11 {offsets = [0, 32], sizes = [16, 32], strides = [1, 1]} : vector<16x128xf32> to vector<16x32xf32>
    %cst_13 = arith.constant dense<0.000000e+00> : vector<16x16xf32>
    %32 = tpu.matmul %29, %30, %cst_13 {dimension_numbers = #tpu.dot_dimension_numbers<[1], [1], [0], [0], [0, 0, 1, 0], [], []>} : vector<16x32xf32>, vector<16x32xf32>, vector<16x16xf32> -> vector<16x16xf32>
    %cst_14 = arith.constant 0xFF800000 : f32
    %33 = vector.broadcast %cst_14 : f32 to vector<16x16xf32>
    %34 = arith.select %5, %32, %33 : vector<16x16xi1>, vector<16x16xf32>
    %cst_15 = arith.constant dense<0xFF800000> : vector<16xf32>
    %35 = vector.multi_reduction <maximumf>, %34, %cst_15 [1] : vector<16x16xf32> to vector<16xf32>
    %36 = vector.shape_cast %35 : vector<16xf32> to vector<16x1xf32>
    %37 = vector.broadcast %36 : vector<16x1xf32> to vector<16x16xf32>
    %38 = arith.subf %34, %37 : vector<16x16xf32>
    %39 = math.exp %38 : vector<16x16xf32>
    %cst_16 = arith.constant dense<0.000000e+00> : vector<16xf32>
    %40 = vector.multi_reduction <add>, %39, %cst_16 [1] : vector<16x16xf32> to vector<16xf32>
    %41 = vector.shape_cast %40 : vector<16xf32> to vector<16x1xf32>
    %42 = tpu.reciprocal %41 : vector<16x1xf32> -> vector<16x1xf32>
    %43 = vector.broadcast %42 : vector<16x1xf32> to vector<16x16xf32>
    %44 = arith.mulf %39, %43 : vector<16x16xf32>
    %cst_17 = arith.constant dense<0.000000e+00> : vector<16x32xf32>
    %45 = tpu.matmul %44, %31, %cst_17 {dimension_numbers = #tpu.dot_dimension_numbers<[1], [0], [0], [1], [0, 0, 1, 1], [], []>} : vector<16x16xf32>, vector<16x32xf32>, vector<16x32xf32> -> vector<16x32xf32>
    %46 = vector.extract_strided_slice %9 {offsets = [0, 64], sizes = [16, 32], strides = [1, 1]} : vector<16x128xf32> to vector<16x32xf32>
    %47 = vector.extract_strided_slice %10 {offsets = [0, 64], sizes = [16, 32], strides = [1, 1]} : vector<16x128xf32> to vector<16x32xf32>
    %48 = vector.extract_strided_slice %11 {offsets = [0, 64], sizes = [16, 32], strides = [1, 1]} : vector<16x128xf32> to vector<16x32xf32>
    %cst_18 = arith.constant dense<0.000000e+00> : vector<16x16xf32>
    %49 = tpu.matmul %46, %47, %cst_18 {dimension_numbers = #tpu.dot_dimension_numbers<[1], [1], [0], [0], [0, 0, 1, 0], [], []>} : vector<16x32xf32>, vector<16x32xf32>, vector<16x16xf32> -> vector<16x16xf32>
    %cst_19 = arith.constant 0xFF800000 : f32
    %50 = vector.broadcast %cst_19 : f32 to vector<16x16xf32>
    %51 = arith.select %5, %49, %50 : vector<16x16xi1>, vector<16x16xf32>
    %cst_20 = arith.constant dense<0xFF800000> : vector<16xf32>
    %52 = vector.multi_reduction <maximumf>, %51, %cst_20 [1] : vector<16x16xf32> to vector<16xf32>
    %53 = vector.shape_cast %52 : vector<16xf32> to vector<16x1xf32>
    %54 = vector.broadcast %53 : vector<16x1xf32> to vector<16x16xf32>
    %55 = arith.subf %51, %54 : vector<16x16xf32>
    %56 = math.exp %55 : vector<16x16xf32>
    %cst_21 = arith.constant dense<0.000000e+00> : vector<16xf32>
    %57 = vector.multi_reduction <add>, %56, %cst_21 [1] : vector<16x16xf32> to vector<16xf32>
    %58 = vector.shape_cast %57 : vector<16xf32> to vector<16x1xf32>
    %59 = tpu.reciprocal %58 : vector<16x1xf32> -> vector<16x1xf32>
    %60 = vector.broadcast %59 : vector<16x1xf32> to vector<16x16xf32>
    %61 = arith.mulf %56, %60 : vector<16x16xf32>
    %cst_22 = arith.constant dense<0.000000e+00> : vector<16x32xf32>
    %62 = tpu.matmul %61, %48, %cst_22 {dimension_numbers = #tpu.dot_dimension_numbers<[1], [0], [0], [1], [0, 0, 1, 1], [], []>} : vector<16x16xf32>, vector<16x32xf32>, vector<16x32xf32> -> vector<16x32xf32>
    %63 = vector.extract_strided_slice %9 {offsets = [0, 96], sizes = [16, 32], strides = [1, 1]} : vector<16x128xf32> to vector<16x32xf32>
    %64 = vector.extract_strided_slice %10 {offsets = [0, 96], sizes = [16, 32], strides = [1, 1]} : vector<16x128xf32> to vector<16x32xf32>
    %65 = vector.extract_strided_slice %11 {offsets = [0, 96], sizes = [16, 32], strides = [1, 1]} : vector<16x128xf32> to vector<16x32xf32>
    %cst_23 = arith.constant dense<0.000000e+00> : vector<16x16xf32>
    %66 = tpu.matmul %63, %64, %cst_23 {dimension_numbers = #tpu.dot_dimension_numbers<[1], [1], [0], [0], [0, 0, 1, 0], [], []>} : vector<16x32xf32>, vector<16x32xf32>, vector<16x16xf32> -> vector<16x16xf32>
    %cst_24 = arith.constant 0xFF800000 : f32
    %67 = vector.broadcast %cst_24 : f32 to vector<16x16xf32>
    %68 = arith.select %5, %66, %67 : vector<16x16xi1>, vector<16x16xf32>
    %cst_25 = arith.constant dense<0xFF800000> : vector<16xf32>
    %69 = vector.multi_reduction <maximumf>, %68, %cst_25 [1] : vector<16x16xf32> to vector<16xf32>
    %70 = vector.shape_cast %69 : vector<16xf32> to vector<16x1xf32>
    %71 = vector.broadcast %70 : vector<16x1xf32> to vector<16x16xf32>
    %72 = arith.subf %68, %71 : vector<16x16xf32>
    %73 = math.exp %72 : vector<16x16xf32>
    %cst_26 = arith.constant dense<0.000000e+00> : vector<16xf32>
    %74 = vector.multi_reduction <add>, %73, %cst_26 [1] : vector<16x16xf32> to vector<16xf32>
    %75 = vector.shape_cast %74 : vector<16xf32> to vector<16x1xf32>
    %76 = tpu.reciprocal %75 : vector<16x1xf32> -> vector<16x1xf32>
    %77 = vector.broadcast %76 : vector<16x1xf32> to vector<16x16xf32>
    %78 = arith.mulf %73, %77 : vector<16x16xf32>
    %cst_27 = arith.constant dense<0.000000e+00> : vector<16x32xf32>
    %79 = tpu.matmul %78, %65, %cst_27 {dimension_numbers = #tpu.dot_dimension_numbers<[1], [0], [0], [1], [0, 0, 1, 1], [], []>} : vector<16x16xf32>, vector<16x32xf32>, vector<16x32xf32> -> vector<16x32xf32>
    %80 = tpu.concatenate %28, %45, %62, %79 in 1 : vector<16x32xf32>, vector<16x32xf32>, vector<16x32xf32>, vector<16x32xf32> -> vector<16x128xf32>
    %cst_28 = arith.constant dense<0.000000e+00> : vector<16x128xf32>
    %81 = tpu.matmul %80, %1, %cst_28 {dimension_numbers = #tpu.dot_dimension_numbers<[1], [0], [0], [1], [0, 0, 1, 1], [], []>} : vector<16x128xf32>, vector<128x128xf32>, vector<16x128xf32> -> vector<16x128xf32>
    %82 = vector.broadcast %2 : vector<1x128xf32> to vector<16x128xf32>
    %83 = arith.addf %81, %82 : vector<16x128xf32>
    %c0_29 = arith.constant 0 : index
    %c0_30 = arith.constant 0 : index
    %c0_31 = arith.constant 0 : index
    %84 = vector.load %arg5[%c0_29, %c0_30, %c0_31] : memref<2x16x128xf32, #tpu.memory_space<vmem>>, vector<1x16x128xf32>
    %85 = vector.shape_cast %84 : vector<1x16x128xf32> to vector<16x128xf32>
    %86 = vector.shape_cast %83 : vector<16x128xf32> to vector<1x16x128xf32>
    tpu.vector_store %arg5[%c0_29, %c0_30, %c0_31], %86 {strides = array<i32>} : memref<2x16x128xf32, #tpu.memory_space<vmem>>, vector<1x16x128xf32>,
    %c1 = arith.constant 1 : index
    %c0_32 = arith.constant 0 : index
    %c0_33 = arith.constant 0 : index
    %87 = vector.load %arg1[%c1, %c0_32, %c0_33] : memref<2x16x128xf32, #tpu.memory_space<vmem>>, vector<1x16x128xf32>
    %88 = vector.shape_cast %87 : vector<1x16x128xf32> to vector<16x128xf32>
    %cst_34 = arith.constant dense<0.000000e+00> : vector<16x384xf32>
    %89 = tpu.matmul %88, %0, %cst_34 {dimension_numbers = #tpu.dot_dimension_numbers<[1], [0], [0], [1], [0, 0, 1, 1], [], []>} : vector<16x128xf32>, vector<128x384xf32>, vector<16x384xf32> -> vector<16x384xf32>
    %90 = vector.extract_strided_slice %89 {offsets = [0, 0], sizes = [16, 128], strides = [1, 1]} : vector<16x384xf32> to vector<16x128xf32>
    %91 = vector.extract_strided_slice %89 {offsets = [0, 128], sizes = [16, 128], strides = [1, 1]} : vector<16x384xf32> to vector<16x128xf32>
    %92 = vector.extract_strided_slice %89 {offsets = [0, 256], sizes = [16, 128], strides = [1, 1]} : vector<16x384xf32> to vector<16x128xf32>
    %93 = vector.extract_strided_slice %90 {offsets = [0, 0], sizes = [16, 32], strides = [1, 1]} : vector<16x128xf32> to vector<16x32xf32>
    %94 = vector.extract_strided_slice %91 {offsets = [0, 0], sizes = [16, 32], strides = [1, 1]} : vector<16x128xf32> to vector<16x32xf32>
    %95 = vector.extract_strided_slice %92 {offsets = [0, 0], sizes = [16, 32], strides = [1, 1]} : vector<16x128xf32> to vector<16x32xf32>
    %cst_35 = arith.constant dense<0.000000e+00> : vector<16x16xf32>
    %96 = tpu.matmul %93, %94, %cst_35 {dimension_numbers = #tpu.dot_dimension_numbers<[1], [1], [0], [0], [0, 0, 1, 0], [], []>} : vector<16x32xf32>, vector<16x32xf32>, vector<16x16xf32> -> vector<16x16xf32>
    %cst_36 = arith.constant 0xFF800000 : f32
    %97 = vector.broadcast %cst_36 : f32 to vector<16x16xf32>
    %98 = arith.select %5, %96, %97 : vector<16x16xi1>, vector<16x16xf32>
    %cst_37 = arith.constant dense<0xFF800000> : vector<16xf32>
    %99 = vector.multi_reduction <maximumf>, %98, %cst_37 [1] : vector<16x16xf32> to vector<16xf32>
    %100 = vector.shape_cast %99 : vector<16xf32> to vector<16x1xf32>
    %101 = vector.broadcast %100 : vector<16x1xf32> to vector<16x16xf32>
    %102 = arith.subf %98, %101 : vector<16x16xf32>
    %103 = math.exp %102 : vector<16x16xf32>
    %cst_38 = arith.constant dense<0.000000e+00> : vector<16xf32>
    %104 = vector.multi_reduction <add>, %103, %cst_38 [1] : vector<16x16xf32> to vector<16xf32>
    %105 = vector.shape_cast %104 : vector<16xf32> to vector<16x1xf32>
    %106 = tpu.reciprocal %105 : vector<16x1xf32> -> vector<16x1xf32>
    %107 = vector.broadcast %106 : vector<16x1xf32> to vector<16x16xf32>
    %108 = arith.mulf %103, %107 : vector<16x16xf32>
    %cst_39 = arith.constant dense<0.000000e+00> : vector<16x32xf32>
    %109 = tpu.matmul %108, %95, %cst_39 {dimension_numbers = #tpu.dot_dimension_numbers<[1], [0], [0], [1], [0, 0, 1, 1], [], []>} : vector<16x16xf32>, vector<16x32xf32>, vector<16x32xf32> -> vector<16x32xf32>
    %110 = vector.extract_strided_slice %90 {offsets = [0, 32], sizes = [16, 32], strides = [1, 1]} : vector<16x128xf32> to vector<16x32xf32>
    %111 = vector.extract_strided_slice %91 {offsets = [0, 32], sizes = [16, 32], strides = [1, 1]} : vector<16x128xf32> to vector<16x32xf32>
    %112 = vector.extract_strided_slice %92 {offsets = [0, 32], sizes = [16, 32], strides = [1, 1]} : vector<16x128xf32> to vector<16x32xf32>
    %cst_40 = arith.constant dense<0.000000e+00> : vector<16x16xf32>
    %113 = tpu.matmul %110, %111, %cst_40 {dimension_numbers = #tpu.dot_dimension_numbers<[1], [1], [0], [0], [0, 0, 1, 0], [], []>} : vector<16x32xf32>, vector<16x32xf32>, vector<16x16xf32> -> vector<16x16xf32>
    %cst_41 = arith.constant 0xFF800000 : f32
    %114 = vector.broadcast %cst_41 : f32 to vector<16x16xf32>
    %115 = arith.select %5, %113, %114 : vector<16x16xi1>, vector<16x16xf32>
    %cst_42 = arith.constant dense<0xFF800000> : vector<16xf32>
    %116 = vector.multi_reduction <maximumf>, %115, %cst_42 [1] : vector<16x16xf32> to vector<16xf32>
    %117 = vector.shape_cast %116 : vector<16xf32> to vector<16x1xf32>
    %118 = vector.broadcast %117 : vector<16x1xf32> to vector<16x16xf32>
    %119 = arith.subf %115, %118 : vector<16x16xf32>
    %120 = math.exp %119 : vector<16x16xf32>
    %cst_43 = arith.constant dense<0.000000e+00> : vector<16xf32>
    %121 = vector.multi_reduction <add>, %120, %cst_43 [1] : vector<16x16xf32> to vector<16xf32>
    %122 = vector.shape_cast %121 : vector<16xf32> to vector<16x1xf32>
    %123 = tpu.reciprocal %122 : vector<16x1xf32> -> vector<16x1xf32>
    %124 = vector.broadcast %123 : vector<16x1xf32> to vector<16x16xf32>
    %125 = arith.mulf %120, %124 : vector<16x16xf32>
    %cst_44 = arith.constant dense<0.000000e+00> : vector<16x32xf32>
    %126 = tpu.matmul %125, %112, %cst_44 {dimension_numbers = #tpu.dot_dimension_numbers<[1], [0], [0], [1], [0, 0, 1, 1], [], []>} : vector<16x16xf32>, vector<16x32xf32>, vector<16x32xf32> -> vector<16x32xf32>
    %127 = vector.extract_strided_slice %90 {offsets = [0, 64], sizes = [16, 32], strides = [1, 1]} : vector<16x128xf32> to vector<16x32xf32>
    %128 = vector.extract_strided_slice %91 {offsets = [0, 64], sizes = [16, 32], strides = [1, 1]} : vector<16x128xf32> to vector<16x32xf32>
    %129 = vector.extract_strided_slice %92 {offsets = [0, 64], sizes = [16, 32], strides = [1, 1]} : vector<16x128xf32> to vector<16x32xf32>
    %cst_45 = arith.constant dense<0.000000e+00> : vector<16x16xf32>
    %130 = tpu.matmul %127, %128, %cst_45 {dimension_numbers = #tpu.dot_dimension_numbers<[1], [1], [0], [0], [0, 0, 1, 0], [], []>} : vector<16x32xf32>, vector<16x32xf32>, vector<16x16xf32> -> vector<16x16xf32>
    %cst_46 = arith.constant 0xFF800000 : f32
    %131 = vector.broadcast %cst_46 : f32 to vector<16x16xf32>
    %132 = arith.select %5, %130, %131 : vector<16x16xi1>, vector<16x16xf32>
    %cst_47 = arith.constant dense<0xFF800000> : vector<16xf32>
    %133 = vector.multi_reduction <maximumf>, %132, %cst_47 [1] : vector<16x16xf32> to vector<16xf32>
    %134 = vector.shape_cast %133 : vector<16xf32> to vector<16x1xf32>
    %135 = vector.broadcast %134 : vector<16x1xf32> to vector<16x16xf32>
    %136 = arith.subf %132, %135 : vector<16x16xf32>
    %137 = math.exp %136 : vector<16x16xf32>
    %cst_48 = arith.constant dense<0.000000e+00> : vector<16xf32>
    %138 = vector.multi_reduction <add>, %137, %cst_48 [1] : vector<16x16xf32> to vector<16xf32>
    %139 = vector.shape_cast %138 : vector<16xf32> to vector<16x1xf32>
    %140 = tpu.reciprocal %139 : vector<16x1xf32> -> vector<16x1xf32>
    %141 = vector.broadcast %140 : vector<16x1xf32> to vector<16x16xf32>
    %142 = arith.mulf %137, %141 : vector<16x16xf32>
    %cst_49 = arith.constant dense<0.000000e+00> : vector<16x32xf32>
    %143 = tpu.matmul %142, %129, %cst_49 {dimension_numbers = #tpu.dot_dimension_numbers<[1], [0], [0], [1], [0, 0, 1, 1], [], []>} : vector<16x16xf32>, vector<16x32xf32>, vector<16x32xf32> -> vector<16x32xf32>
    %144 = vector.extract_strided_slice %90 {offsets = [0, 96], sizes = [16, 32], strides = [1, 1]} : vector<16x128xf32> to vector<16x32xf32>
    %145 = vector.extract_strided_slice %91 {offsets = [0, 96], sizes = [16, 32], strides = [1, 1]} : vector<16x128xf32> to vector<16x32xf32>
    %146 = vector.extract_strided_slice %92 {offsets = [0, 96], sizes = [16, 32], strides = [1, 1]} : vector<16x128xf32> to vector<16x32xf32>
    %cst_50 = arith.constant dense<0.000000e+00> : vector<16x16xf32>
    %147 = tpu.matmul %144, %145, %cst_50 {dimension_numbers = #tpu.dot_dimension_numbers<[1], [1], [0], [0], [0, 0, 1, 0], [], []>} : vector<16x32xf32>, vector<16x32xf32>, vector<16x16xf32> -> vector<16x16xf32>
    %cst_51 = arith.constant 0xFF800000 : f32
    %148 = vector.broadcast %cst_51 : f32 to vector<16x16xf32>
    %149 = arith.select %5, %147, %148 : vector<16x16xi1>, vector<16x16xf32>
    %cst_52 = arith.constant dense<0xFF800000> : vector<16xf32>
    %150 = vector.multi_reduction <maximumf>, %149, %cst_52 [1] : vector<16x16xf32> to vector<16xf32>
    %151 = vector.shape_cast %150 : vector<16xf32> to vector<16x1xf32>
    %152 = vector.broadcast %151 : vector<16x1xf32> to vector<16x16xf32>
    %153 = arith.subf %149, %152 : vector<16x16xf32>
    %154 = math.exp %153 : vector<16x16xf32>
    %cst_53 = arith.constant dense<0.000000e+00> : vector<16xf32>
    %155 = vector.multi_reduction <add>, %154, %cst_53 [1] : vector<16x16xf32> to vector<16xf32>
    %156 = vector.shape_cast %155 : vector<16xf32> to vector<16x1xf32>
    %157 = tpu.reciprocal %156 : vector<16x1xf32> -> vector<16x1xf32>
    %158 = vector.broadcast %157 : vector<16x1xf32> to vector<16x16xf32>
    %159 = arith.mulf %154, %158 : vector<16x16xf32>
    %cst_54 = arith.constant dense<0.000000e+00> : vector<16x32xf32>
    %160 = tpu.matmul %159, %146, %cst_54 {dimension_numbers = #tpu.dot_dimension_numbers<[1], [0], [0], [1], [0, 0, 1, 1], [], []>} : vector<16x16xf32>, vector<16x32xf32>, vector<16x32xf32> -> vector<16x32xf32>
    %161 = tpu.concatenate %109, %126, %143, %160 in 1 : vector<16x32xf32>, vector<16x32xf32>, vector<16x32xf32>, vector<16x32xf32> -> vector<16x128xf32>
    %cst_55 = arith.constant dense<0.000000e+00> : vector<16x128xf32>
    %162 = tpu.matmul %161, %1, %cst_55 {dimension_numbers = #tpu.dot_dimension_numbers<[1], [0], [0], [1], [0, 0, 1, 1], [], []>} : vector<16x128xf32>, vector<128x128xf32>, vector<16x128xf32> -> vector<16x128xf32>
    %163 = vector.broadcast %2 : vector<1x128xf32> to vector<16x128xf32>
    %164 = arith.addf %162, %163 : vector<16x128xf32>
    %c1_56 = arith.constant 1 : index
    %c0_57 = arith.constant 0 : index
    %c0_58 = arith.constant 0 : index
    %165 = vector.load %arg5[%c1_56, %c0_57, %c0_58] : memref<2x16x128xf32, #tpu.memory_space<vmem>>, vector<1x16x128xf32>
    %166 = vector.shape_cast %165 : vector<1x16x128xf32> to vector<16x128xf32>
    %167 = vector.shape_cast %164 : vector<16x128xf32> to vector<1x16x128xf32>
    tpu.vector_store %arg5[%c1_56, %c0_57, %c0_58], %167 {strides = array<i32>} : memref<2x16x128xf32, #tpu.memory_space<vmem>>, vector<1x16x128xf32>,
    return
  }
  func.func @transform_0(%arg0: i32) -> (i32, i32, i32) {
    %c0_i32 = arith.constant 0 : i32
    %c0_i32_0 = arith.constant 0 : i32
    %c0_i32_1 = arith.constant 0 : i32
    %c0_i32_2 = arith.constant 0 : i32
    return %c0_i32, %c0_i32_0, %c0_i32_1 : i32, i32, i32
  }
  func.func @transform_1(%arg0: i32) -> (i32, i32) {
    %c0_i32 = arith.constant 0 : i32
    %c0_i32_0 = arith.constant 0 : i32
    %c0_i32_1 = arith.constant 0 : i32
    return %c0_i32, %c0_i32_0 : i32, i32
  }
  func.func @transform_2(%arg0: i32) -> (i32, i32) {
    %c0_i32 = arith.constant 0 : i32
    %c0_i32_0 = arith.constant 0 : i32
    %c0_i32_1 = arith.constant 0 : i32
    return %c0_i32, %c0_i32_0 : i32, i32
  }
  func.func @transform_3(%arg0: i32) -> (i32, i32) {
    %c0_i32 = arith.constant 0 : i32
    %c0_i32_0 = arith.constant 0 : i32
    %c0_i32_1 = arith.constant 0 : i32
    return %c0_i32, %c0_i32_0 : i32, i32
  }
  func.func @transform_4(%arg0: i32) -> (i32, i32, i32) {
    %c0_i32 = arith.constant 0 : i32
    %c0_i32_0 = arith.constant 0 : i32
    %c0_i32_1 = arith.constant 0 : i32
    %c0_i32_2 = arith.constant 0 : i32
    return %c0_i32, %c0_i32_0, %c0_i32_1 : i32, i32, i32
  }
}

</mosaic_0001>

<llo_original>
// kernel: tpu_custom_call.1
$region0: #{tpu_custom_call.1}
  #allocation0 [shape = 'u32[]', space=smem, size = 0x4, offset = 0x4, fixed_abs, tag = 'smem constant byte address 0x4 - core index']
  #allocation1 [shape = 'u32[144,128]{1,0:T(1,128)}', space=vmem, size = 0x12000, scoped, tag = 'internal scratch']
  %s0 = inlined_call_operand.hbm [shape: f32[2,16,128], index: 0, kind: input, shape index: {}]
  %s1 = inlined_call_operand.hbm [shape: f32[128,384], index: 1, kind: input, shape index: {}]
  %s2 = inlined_call_operand.hbm [shape: f32[128,128], index: 2, kind: input, shape index: {}]
  %s3 = inlined_call_operand.vmem [shape: f32[1,128], index: 3, kind: input, shape index: {}]
  %s4 = inlined_call_operand.hbm [shape: f32[2,16,128], index: 4, kind: output, shape index: {}]
  %s5 = sld [smem:[#allocation0]]
  $region38: #{tpu_custom_call.1} parent=0
    _
  %s7 = ssub.s32 1, %s5
  %s8 = scalar_select 0, %s7, %s5
  $region1: #{tpu_custom_call.1} parent=0
    #allocation2 [shape = 'u8[16384]{0}', space=vmem, size = 0x4000, scoped, tag = 'input window, operand 0, single buffered']
    #allocation3 [shape = 's32[1]{0}', space=sflag, size = 0x4, scoped, tag = 'scoped memory for tpu_custom_call.1']
    #allocation4 [shape = 's32[1]{0}', space=sflag, size = 0x4, scoped, tag = 'scoped memory for tpu_custom_call.1']
    #allocation5 [shape = 'u8[196608]{0}', space=vmem, size = 0x30000, scoped, tag = 'input window, operand 1, single buffered']
    #allocation6 [shape = 's32[1]{0}', space=sflag, size = 0x4, scoped, tag = 'scoped memory for tpu_custom_call.1']
    #allocation7 [shape = 'u8[65536]{0}', space=vmem, size = 0x10000, scoped, tag = 'input window, operand 2, single buffered']
    #allocation8 [shape = 'u8[16384]{0}', space=vmem, size = 0x4000, scoped, tag = 'output window, operand 0, single buffered']
    %9 = vsyncpa [#allocation3], 0
    %10 = vsyncpa [#allocation6], 0
    %11 = vsyncpa [#allocation4], 0
    // Predicated region
    $region2: #{tpu_custom_call.1} parent=1 // pred_check
      _
    $region3: #{tpu_custom_call.1} parent=1 // pred_check_branch
      %13 = sbr.rel (0) target = $region5
    $region4: #{tpu_custom_call.1} parent=1 // pred_region
      %s15 = ssub.s32 512, 512
      %16 = vsyncadd [#allocation3], %s15
      %s17 = sshll.u32 [#allocation2], 4
      %s18 = int_to_ptr.vmem [resolvable:$true] %s17
      %23 = dma.hbm_to_vmem [thread:$0]  %s0, 512, %s18, [#allocation3], 128, 128, 8
    $region5: #{tpu_custom_call.1} parent=1 // pred_fallthru
      _
    // Predicated region
    $region6: #{tpu_custom_call.1} parent=1 // pred_check
      _
    $region7: #{tpu_custom_call.1} parent=1 // pred_check_branch
      %25 = sbr.rel (0) target = $region9
    $region8: #{tpu_custom_call.1} parent=1 // pred_region
      %s27 = ssub.s32 6144, 6144
      %28 = vsyncadd [#allocation6], %s27
      %s29 = sshll.u32 [#allocation5], 4
      %s30 = int_to_ptr.vmem [resolvable:$true] %s29
      %35 = dma.hbm_to_vmem [thread:$0]  %s1, 6144, %s30, [#allocation6], 384, 384, 24
    $region9: #{tpu_custom_call.1} parent=1 // pred_fallthru
      _
    // Predicated region
    $region10: #{tpu_custom_call.1} parent=1 // pred_check
      _
    $region11: #{tpu_custom_call.1} parent=1 // pred_check_branch
      %37 = sbr.rel (0) target = $region13
    $region12: #{tpu_custom_call.1} parent=1 // pred_region
      %s39 = ssub.s32 2048, 2048
      %40 = vsyncadd [#allocation6], %s39
      %s41 = sshll.u32 [#allocation7], 4
      %s42 = int_to_ptr.vmem [resolvable:$true] %s41
      %47 = dma.hbm_to_vmem [thread:$0]  %s2, 2048, %s42, [#allocation6], 128, 128, 8
    $region13: #{tpu_custom_call.1} parent=1 // pred_fallthru
      _
    // Predicated region
    $region14: #{tpu_custom_call.1} parent=1 // pred_check
      _
    $region15: #{tpu_custom_call.1} parent=1 // pred_check_branch
      %49 = sbr.rel (0) target = $region17
    $region16: #{tpu_custom_call.1} parent=1 // pred_region
      _
    $region17: #{tpu_custom_call.1} parent=1 // pred_fallthru
      _
    // Predicated region
    $region18: #{tpu_custom_call.1} parent=1 // pred_check
      _
    $region19: #{tpu_custom_call.1} parent=1 // pred_check_branch
      %51 = sbr.rel (0) target = $region21
    $region20: #{tpu_custom_call.1} parent=1 // pred_region
      %52 = dma.done [#allocation3], 512
    $region21: #{tpu_custom_call.1} parent=1 // pred_fallthru
      _
    // Predicated region
    $region22: #{tpu_custom_call.1} parent=1 // pred_check
      _
    $region23: #{tpu_custom_call.1} parent=1 // pred_check_branch
      %54 = sbr.rel (0) target = $region25
    $region24: #{tpu_custom_call.1} parent=1 // pred_region
      %55 = dma.done [#allocation6], 6144
    $region25: #{tpu_custom_call.1} parent=1 // pred_fallthru
      _
    // Predicated region
    $region26: #{tpu_custom_call.1} parent=1 // pred_check
      _
    $region27: #{tpu_custom_call.1} parent=1 // pred_check_branch
      %57 = sbr.rel (0) target = $region29
    $region28: #{tpu_custom_call.1} parent=1 // pred_region
      %58 = dma.done [#allocation6], 2048
    $region29: #{tpu_custom_call.1} parent=1 // pred_fallthru
      _
    %v59 = vld [vmem:[#allocation5] sm:$0xff]
    %v60 = vld [vmem:[#allocation5 + $0x8] sm:$0xff]
    %v61 = vld [vmem:[#allocation5 + $0x10] sm:$0xff]
    %v62 = vld [vmem:[#allocation5 + $0x18] sm:$0xff]
    %v63 = vld [vmem:[#allocation5 + $0x20] sm:$0xff]
    %v64 = vld [vmem:[#allocation5 + $0x28] sm:$0xff]
    %v65 = vld [vmem:[#allocation5 + $0x30] sm:$0xff]
    %v66 = vld [vmem:[#allocation5 + $0x38] sm:$0xff]
    %v67 = vld [vmem:[#allocation5 + $0x40] sm:$0xff]
    %v68 = vld [vmem:[#allocation5 + $0x48] sm:$0xff]
    %v69 = vld [vmem:[#allocation5 + $0x50] sm:$0xff]
    %v70 = vld [vmem:[#allocation5 + $0x58] sm:$0xff]
    %v71 = vld [vmem:[#allocation5 + $0x60] sm:$0xff]
    %v72 = vld [vmem:[#allocation5 + $0x68] sm:$0xff]
    %v73 = vld [vmem:[#allocation5 + $0x70] sm:$0xff]
    %v74 = vld [vmem:[#allocation5 + $0x78] sm:$0xff]
    %v75 = vld [vmem:[#allocation5 + $0x80] sm:$0xff]
    %v76 = vld [vmem:[#allocation5 + $0x88] sm:$0xff]
    %v77 = vld [vmem:[#allocation5 + $0x90] sm:$0xff]
    %v78 = vld [vmem:[#allocation5 + $0x98] sm:$0xff]
    %v79 = vld [vmem:[#allocation5 + $0xa0] sm:$0xff]
    %v80 = vld [vmem:[#allocation5 + $0xa8] sm:$0xff]
    %v81 = vld [vmem:[#allocation5 + $0xb0] sm:$0xff]
    %v82 = vld [vmem:[#allocation5 + $0xb8] sm:$0xff]
    %v83 = vld [vmem:[#allocation5 + $0xc0] sm:$0xff]
    %v84 = vld [vmem:[#allocation5 + $0xc8] sm:$0xff]
    %v85 = vld [vmem:[#allocation5 + $0xd0] sm:$0xff]
    %v86 = vld [vmem:[#allocation5 + $0xd8] sm:$0xff]
    %v87 = vld [vmem:[#allocation5 + $0xe0] sm:$0xff]
    %v88 = vld [vmem:[#allocation5 + $0xe8] sm:$0xff]
    %v89 = vld [vmem:[#allocation5 + $0xf0] sm:$0xff]
    %v90 = vld [vmem:[#allocation5 + $0xf8] sm:$0xff]
    %v91 = vld [vmem:[#allocation5 + $0x100] sm:$0xff]
    %v92 = vld [vmem:[#allocation5 + $0x108] sm:$0xff]
    %v93 = vld [vmem:[#allocation5 + $0x110] sm:$0xff]
    %v94 = vld [vmem:[#allocation5 + $0x118] sm:$0xff]
    %v95 = vld [vmem:[#allocation5 + $0x120] sm:$0xff]
    %v96 = vld [vmem:[#allocation5 + $0x128] sm:$0xff]
    %v97 = vld [vmem:[#allocation5 + $0x130] sm:$0xff]
    %v98 = vld [vmem:[#allocation5 + $0x138] sm:$0xff]
    %v99 = vld [vmem:[#allocation5 + $0x140] sm:$0xff]
    %v100 = vld [vmem:[#allocation5 + $0x148] sm:$0xff]
    %v101 = vld [vmem:[#allocation5 + $0x150] sm:$0xff]
    %v102 = vld [vmem:[#allocation5 + $0x158] sm:$0xff]
    %v103 = vld [vmem:[#allocation5 + $0x160] sm:$0xff]
    %v104 = vld [vmem:[#allocation5 + $0x168] sm:$0xff]
    %v105 = vld [vmem:[#allocation5 + $0x170] sm:$0xff]
    %v106 = vld [vmem:[#allocation5 + $0x178] sm:$0xff]
    %v107 = vld [vmem:[#allocation7] sm:$0xff]
    %v108 = vld [vmem:[#allocation7 + $0x8] sm:$0xff]
    %v109 = vld [vmem:[#allocation7 + $0x10] sm:$0xff]
    %v110 = vld [vmem:[#allocation7 + $0x18] sm:$0xff]
    %v111 = vld [vmem:[#allocation7 + $0x20] sm:$0xff]
    %v112 = vld [vmem:[#allocation7 + $0x28] sm:$0xff]
    %v113 = vld [vmem:[#allocation7 + $0x30] sm:$0xff]
    %v114 = vld [vmem:[#allocation7 + $0x38] sm:$0xff]
    %v115 = vld [vmem:[#allocation7 + $0x40] sm:$0xff]
    %v116 = vld [vmem:[#allocation7 + $0x48] sm:$0xff]
    %v117 = vld [vmem:[#allocation7 + $0x50] sm:$0xff]
    %v118 = vld [vmem:[#allocation7 + $0x58] sm:$0xff]
    %v119 = vld [vmem:[#allocation7 + $0x60] sm:$0xff]
    %v120 = vld [vmem:[#allocation7 + $0x68] sm:$0xff]
    %v121 = vld [vmem:[#allocation7 + $0x70] sm:$0xff]
    %v122 = vld [vmem:[#allocation7 + $0x78] sm:$0xff]
    %v123 = vld [vmem:[%s3] sm:$0x1]
    %v124 = vlaneseq
    %v125 = vshrl.u32 %v124, 7
    %v126 = vadd.s32 %v125, 8
    %v127 = vlaneseq
    %v128 = vand.u32 %v127, 127
    %vm129 = vcmp.le.s32.totalorder %v128, %v125
    %vm130 = vcmp.le.s32.totalorder %v128, %v126
    %v131 = vld [vmem:[#allocation2] sm:$0xff]
    %v132 = vld [vmem:[#allocation2 + $0x8] sm:$0xff]
    %133 = vmatprep.subr.mxu0 %v60
    %134 = vmatpush1.msra.mxu0 %v59
    %135 = vmatprep.subr.mxu0 %v63
    %136 = vmatpush1.msra.mxu0 %v62
    %137 = vmatprep.subr.mxu0 %v66
    %138 = vmatpush1.msra.mxu0 %v65
    %139 = vmatprep.subr.mxu0 %v69
    %140 = vmatpush1.msra.mxu0 %v68
    %141 = vmatprep.subr.mxu0 %v72
    %142 = vmatpush1.msra.mxu0 %v71
    %143 = vmatprep.subr.mxu0 %v75
    %144 = vmatpush1.msra.mxu0 %v74
    %145 = vmatprep.subr.mxu0 %v78
    %146 = vmatpush1.msra.mxu0 %v77
    %147 = vmatprep.subr.mxu0 %v81
    %148 = vmatpush1.msra.mxu0 %v80
    %149 = vmatprep.subr.mxu0 %v84
    %150 = vmatpush1.msra.mxu0 %v83
    %151 = vmatprep.subr.mxu0 %v87
    %152 = vmatpush1.msra.mxu0 %v86
    %153 = vmatprep.subr.mxu0 %v90
    %154 = vmatpush1.msra.mxu0 %v89
    %155 = vmatprep.subr.mxu0 %v93
    %156 = vmatpush1.msra.mxu0 %v92
    %157 = vmatprep.subr.mxu0 %v96
    %158 = vmatpush1.msra.mxu0 %v95
    %159 = vmatprep.subr.mxu0 %v99
    %160 = vmatpush1.msra.mxu0 %v98
    %161 = vmatprep.subr.mxu0 %v102
    %162 = vmatpush1.msra.mxu0 %v101
    %163 = vmatprep.subr.mxu0 %v105
    %164 = vmatpush1.msra.mxu0 %v104
    %165 = vmatprep.subr.mxu0 0.0
    %166 = vmatpush1.msra.mxu0 0.0
    %167 = vmatprep.subr.mxu0 0.0
    %168 = vmatpush1.msra.mxu0 0.0
    %169 = vmatprep.subr.mxu0 0.0
    %170 = vmatpush1.msra.mxu0 0.0
    %171 = vmatprep.subr.mxu0 0.0
    %172 = vmatpush1.msra.mxu0 0.0
    %173 = vmatprep.subr.mxu0 0.0
    %174 = vmatpush1.msra.mxu0 0.0
    %175 = vmatprep.subr.mxu0 0.0
    %176 = vmatpush1.msra.mxu0 0.0
    %177 = vmatprep.subr.mxu0 0.0
    %178 = vmatpush1.msra.mxu0 0.0
    %179 = vmatprep.subr.mxu0 0.0
    %180 = vmatpush1.msra.mxu0 0.0
    %181 = vmatprep.subr.mxu0 0.0
    %182 = vmatpush1.msra.mxu0 0.0
    %183 = vmatprep.subr.mxu0 0.0
    %184 = vmatpush1.msra.mxu0 0.0
    %185 = vmatprep.subr.mxu0 0.0
    %186 = vmatpush1.msra.mxu0 0.0
    %187 = vmatprep.subr.mxu0 0.0
    %188 = vmatpush1.msra.mxu0 0.0
    %189 = vmatprep.subr.mxu0 0.0
    %190 = vmatpush1.msra.mxu0 0.0
    %191 = vmatprep.subr.mxu0 0.0
    %192 = vmatpush1.msra.mxu0 0.0
    %193 = vmatprep.subr.mxu0 0.0
    %194 = vmatpush1.msra.mxu0 0.0
    %195 = vmatprep.subr.mxu0 0.0
    %196 = vmatpush1.msra.mxu0 0.0
    %197 = vmatprep.mubr.f32.mxu0 0.0
    %198 = vmatmul.mubr.f32.gmra.mrb[0].mxu0 %v131
    %v199 = vpop.f32.mrb[0].mxu0
    %v200 = vadd.f32 0.0, %v199
    %v201 = vpop.f32.mrb[0].mxu0
    %v202 = vadd.f32 0.0, %v201
    %203 = vmatprep.mubr.f32.mxu0 0.0
    %204 = vmatmul.mubr.f32.gmra.mrb[0].mxu0 %v132
    %v205 = vpop.f32.mrb[0].mxu0
    %v206 = vadd.f32 0.0, %v205
    %v207 = vpop.f32.mrb[0].mxu0
    %v208 = vadd.f32 0.0, %v207
    %209 = vdwg.mxu0
    %210 = vmatprep.subr.mxu0 0.0
    %211 = vmatpush1.msra.mxu0 %v61
    %212 = vmatprep.subr.mxu0 0.0
    %213 = vmatpush1.msra.mxu0 %v64
    %214 = vmatprep.subr.mxu0 0.0
    %215 = vmatpush1.msra.mxu0 %v67
    %216 = vmatprep.subr.mxu0 0.0
    %217 = vmatpush1.msra.mxu0 %v70
    %218 = vmatprep.subr.mxu0 0.0
    %219 = vmatpush1.msra.mxu0 %v73
    %220 = vmatprep.subr.mxu0 0.0
    %221 = vmatpush1.msra.mxu0 %v76
    %222 = vmatprep.subr.mxu0 0.0
    %223 = vmatpush1.msra.mxu0 %v79
    %224 = vmatprep.subr.mxu0 0.0
    %225 = vmatpush1.msra.mxu0 %v82
    %226 = vmatprep.subr.mxu0 0.0
    %227 = vmatpush1.msra.mxu0 %v85
    %228 = vmatprep.subr.mxu0 0.0
    %229 = vmatpush1.msra.mxu0 %v88
    %230 = vmatprep.subr.mxu0 0.0
    %231 = vmatpush1.msra.mxu0 %v91
    %232 = vmatprep.subr.mxu0 0.0
    %233 = vmatpush1.msra.mxu0 %v94
    %234 = vmatprep.subr.mxu0 0.0
    %235 = vmatpush1.msra.mxu0 %v97
    %236 = vmatprep.subr.mxu0 0.0
    %237 = vmatpush1.msra.mxu0 %v100
    %238 = vmatprep.subr.mxu0 0.0
    %239 = vmatpush1.msra.mxu0 %v103
    %240 = vmatprep.subr.mxu0 0.0
    %241 = vmatpush1.msra.mxu0 %v106
    %242 = vmatprep.subr.mxu0 0.0
    %243 = vmatpush1.msra.mxu0 0.0
    %244 = vmatprep.subr.mxu0 0.0
    %245 = vmatpush1.msra.mxu0 0.0
    %246 = vmatprep.subr.mxu0 0.0
    %247 = vmatpush1.msra.mxu0 0.0
    %248 = vmatprep.subr.mxu0 0.0
    %249 = vmatpush1.msra.mxu0 0.0
    %250 = vmatprep.subr.mxu0 0.0
    %251 = vmatpush1.msra.mxu0 0.0
    %252 = vmatprep.subr.mxu0 0.0
    %253 = vmatpush1.msra.mxu0 0.0
    %254 = vmatprep.subr.mxu0 0.0
    %255 = vmatpush1.msra.mxu0 0.0
    %256 = vmatprep.subr.mxu0 0.0
    %257 = vmatpush1.msra.mxu0 0.0
    %258 = vmatprep.subr.mxu0 0.0
    %259 = vmatpush1.msra.mxu0 0.0
    %260 = vmatprep.subr.mxu0 0.0
    %261 = vmatpush1.msra.mxu0 0.0
    %262 = vmatprep.subr.mxu0 0.0
    %263 = vmatpush1.msra.mxu0 0.0
    %264 = vmatprep.subr.mxu0 0.0
    %265 = vmatpush1.msra.mxu0 0.0
    %266 = vmatprep.subr.mxu0 0.0
    %267 = vmatpush1.msra.mxu0 0.0
    %268 = vmatprep.subr.mxu0 0.0
    %269 = vmatpush1.msra.mxu0 0.0
    %270 = vmatprep.subr.mxu0 0.0
    %271 = vmatpush1.msra.mxu0 0.0
    %272 = vmatprep.subr.mxu0 0.0
    %273 = vmatpush1.msra.mxu0 0.0
    %274 = vmatprep.mubr.f32.mxu0 0.0
    %275 = vmatmul.mubr.f32.gmra.mrb[0].mxu0 %v131
    %v276 = vpop.f32.mrb[0].mxu0
    %v277 = vadd.f32 0.0, %v276
    %v278 = vpop.f32.mrb[0].mxu0
    %279 = vmatprep.mubr.f32.mxu0 0.0
    %280 = vmatmul.mubr.f32.gmra.mrb[0].mxu0 %v132
    %v281 = vpop.f32.mrb[0].mxu0
    %v282 = vadd.f32 0.0, %v281
    %v283 = vpop.f32.mrb[0].mxu0
    %284 = vdwg.mxu0
    %vm285 = vcmask 261120
    %v287 = vsel %vm285, %v200, 0
    %v290 = vsel %vm285, %v206, 0
    %v293 = vsel %vm285, %v202, 0
    %v296 = vsel %vm285, %v208, 0
    %298 = vmatprep.subr.mxu0 0.0
    %299 = vmatpush1.xpose.msra.mxu0 %v293
    %300 = vmatprep.subr.mxu0 0.0
    %301 = vmatpush1.xpose.msra.mxu0 %v296
    %302 = vmatprep.subr.mxu0 0.0
    %303 = vmatpush1.xpose.msra.mxu0 0.0
    %304 = vmatprep.subr.mxu0 0.0
    %305 = vmatpush1.xpose.msra.mxu0 0.0
    %306 = vmatprep.subr.mxu0 0.0
    %307 = vmatpush1.xpose.msra.mxu0 0.0
    %308 = vmatprep.subr.mxu0 0.0
    %309 = vmatpush1.xpose.msra.mxu0 0.0
    %310 = vmatprep.subr.mxu0 0.0
    %311 = vmatpush1.xpose.msra.mxu0 0.0
    %312 = vmatprep.subr.mxu0 0.0
    %313 = vmatpush1.xpose.msra.mxu0 0.0
    %314 = vmatprep.subr.mxu0 0.0
    %315 = vmatpush1.xpose.msra.mxu0 0.0
    %316 = vmatprep.subr.mxu0 0.0
    %317 = vmatpush1.xpose.msra.mxu0 0.0
    %318 = vmatprep.subr.mxu0 0.0
    %319 = vmatpush1.xpose.msra.mxu0 0.0
    %320 = vmatprep.subr.mxu0 0.0
    %321 = vmatpush1.xpose.msra.mxu0 0.0
    %322 = vmatprep.subr.mxu0 0.0
    %323 = vmatpush1.xpose.msra.mxu0 0.0
    %324 = vmatprep.subr.mxu0 0.0
    %325 = vmatpush1.xpose.msra.mxu0 0.0
    %326 = vmatprep.subr.mxu0 0.0
    %327 = vmatpush1.xpose.msra.mxu0 0.0
    %328 = vmatprep.subr.mxu0 0.0
    %329 = vmatpush1.xpose.msra.mxu0 0.0
    %330 = vmatprep.subr.mxu0 0.0
    %331 = vmatpush1.xpose.msra.mxu0 0.0
    %332 = vmatprep.subr.mxu0 0.0
    %333 = vmatpush1.xpose.msra.mxu0 0.0
    %334 = vmatprep.subr.mxu0 0.0
    %335 = vmatpush1.xpose.msra.mxu0 0.0
    %336 = vmatprep.subr.mxu0 0.0
    %337 = vmatpush1.xpose.msra.mxu0 0.0
    %338 = vmatprep.subr.mxu0 0.0
    %339 = vmatpush1.xpose.msra.mxu0 0.0
    %340 = vmatprep.subr.mxu0 0.0
    %341 = vmatpush1.xpose.msra.mxu0 0.0
    %342 = vmatprep.subr.mxu0 0.0
    %343 = vmatpush1.xpose.msra.mxu0 0.0
    %344 = vmatprep.subr.mxu0 0.0
    %345 = vmatpush1.xpose.msra.mxu0 0.0
    %346 = vmatprep.subr.mxu0 0.0
    %347 = vmatpush1.xpose.msra.mxu0 0.0
    %348 = vmatprep.subr.mxu0 0.0
    %349 = vmatpush1.xpose.msra.mxu0 0.0
    %350 = vmatprep.subr.mxu0 0.0
    %351 = vmatpush1.xpose.msra.mxu0 0.0
    %352 = vmatprep.subr.mxu0 0.0
    %353 = vmatpush1.xpose.msra.mxu0 0.0
    %354 = vmatprep.subr.mxu0 0.0
    %355 = vmatpush1.xpose.msra.mxu0 0.0
    %356 = vmatprep.subr.mxu0 0.0
    %357 = vmatpush1.xpose.msra.mxu0 0.0
    %358 = vmatprep.subr.mxu0 0.0
    %359 = vmatpush1.xpose.msra.mxu0 0.0
    %360 = vmatprep.subr.mxu0 0.0
    %361 = vmatpush1.xpose.msra.mxu0 0.0
    %362 = vmatprep.mubr.f32.mxu0 0.0
    %363 = vmatmul.mubr.f32.gmra.mrb[0].mxu0 %v287
    %v364 = vpop.f32.mrb[0].mxu0
    %v365 = vadd.f32 0.0, %v364
    %v366 = vpop.f32.mrb[0].mxu0
    %367 = vmatprep.mubr.f32.mxu0 0.0
    %368 = vmatmul.mubr.f32.gmra.mrb[0].mxu0 %v290
    %v369 = vpop.f32.mrb[0].mxu0
    %v370 = vadd.f32 0.0, %v369
    %v371 = vpop.f32.mrb[0].mxu0
    %372 = vdwg.mxu0
    %v373 = vsel %vm129, %v365, -inf
    %v374 = vsel %vm130, %v370, -inf
    %vm375 = vcmask 130048
    %v376 = vsel %vm375, %v373, -inf
    %377 = vmax.xlane.f32.xlu0 %v376
    %v378 = vpop.xlane.xlu0 %377
    %v379 = vsel %vm375, %v374, -inf
    %380 = vmax.xlane.f32.xlu0 %v379
    %v381 = vpop.xlane.xlu0 %380
    %v382 = vsub.f32 %v373, %v378
    %v383 = vsub.f32 %v374, %v381
    %v384 = vmul.f32 %v382, 1.442695
    %v385 = vpow.pop %v384
    %v386 = vmul.f32 %v383, 1.442695
    %v387 = vpow.pop %v386
    %v388 = vsel %vm375, %v385, 0.0
    %389 = vadd.xlane.f32.xlu0 %v388
    %v390 = vpop.xlane.xlu0 %389
    %v391 = vsel %vm375, %v387, 0.0
    %392 = vadd.xlane.f32.xlu0 %v391
    %v393 = vpop.xlane.xlu0 %392
    %v394 = vrcp.pop %v390
    %v395 = vrcp.pop %v393
    %v396 = vmul.f32 %v385, %v394
    %v397 = vmul.f32 %v387, %v395
    %v399 = vsel %vm375, %v396, 0
    %v402 = vsel %vm375, %v397, 0
    %404 = vmatprep.subr.mxu0 0.0
    %405 = vmatpush1.msra.mxu0 %v277
    %406 = vmatprep.subr.mxu0 0.0
    %407 = vmatpush1.msra.mxu0 %v282
    %408 = vmatprep.subr.mxu0 0.0
    %409 = vmatpush1.msra.mxu0 0.0
    %410 = vmatprep.subr.mxu0 0.0
    %411 = vmatpush1.msra.mxu0 0.0
    %412 = vmatprep.subr.mxu0 0.0
    %413 = vmatpush1.msra.mxu0 0.0
    %414 = vmatprep.subr.mxu0 0.0
    %415 = vmatpush1.msra.mxu0 0.0
    %416 = vmatprep.subr.mxu0 0.0
    %417 = vmatpush1.msra.mxu0 0.0
    %418 = vmatprep.subr.mxu0 0.0
    %419 = vmatpush1.msra.mxu0 0.0
    %420 = vmatprep.subr.mxu0 0.0
    %421 = vmatpush1.msra.mxu0 0.0
    %422 = vmatprep.subr.mxu0 0.0
    %423 = vmatpush1.msra.mxu0 0.0
    %424 = vmatprep.subr.mxu0 0.0
    %425 = vmatpush1.msra.mxu0 0.0
    %426 = vmatprep.subr.mxu0 0.0
    %427 = vmatpush1.msra.mxu0 0.0
    %428 = vmatprep.subr.mxu0 0.0
    %429 = vmatpush1.msra.mxu0 0.0
    %430 = vmatprep.subr.mxu0 0.0
    %431 = vmatpush1.msra.mxu0 0.0
    %432 = vmatprep.subr.mxu0 0.0
    %433 = vmatpush1.msra.mxu0 0.0
    %434 = vmatprep.subr.mxu0 0.0
    %435 = vmatpush1.msra.mxu0 0.0
    %436 = vmatprep.subr.mxu0 0.0
    %437 = vmatpush1.msra.mxu0 0.0
    %438 = vmatprep.subr.mxu0 0.0
    %439 = vmatpush1.msra.mxu0 0.0
    %440 = vmatprep.subr.mxu0 0.0
    %441 = vmatpush1.msra.mxu0 0.0
    %442 = vmatprep.subr.mxu0 0.0
    %443 = vmatpush1.msra.mxu0 0.0
    %444 = vmatprep.subr.mxu0 0.0
    %445 = vmatpush1.msra.mxu0 0.0
    %446 = vmatprep.subr.mxu0 0.0
    %447 = vmatpush1.msra.mxu0 0.0
    %448 = vmatprep.subr.mxu0 0.0
    %449 = vmatpush1.msra.mxu0 0.0
    %450 = vmatprep.subr.mxu0 0.0
    %451 = vmatpush1.msra.mxu0 0.0
    %452 = vmatprep.subr.mxu0 0.0
    %453 = vmatpush1.msra.mxu0 0.0
    %454 = vmatprep.subr.mxu0 0.0
    %455 = vmatpush1.msra.mxu0 0.0
    %456 = vmatprep.subr.mxu0 0.0
    %457 = vmatpush1.msra.mxu0 0.0
    %458 = vmatprep.subr.mxu0 0.0
    %459 = vmatpush1.msra.mxu0 0.0
    %460 = vmatprep.subr.mxu0 0.0
    %461 = vmatpush1.msra.mxu0 0.0
    %462 = vmatprep.subr.mxu0 0.0
    %463 = vmatpush1.msra.mxu0 0.0
    %464 = vmatprep.subr.mxu0 0.0
    %465 = vmatpush1.msra.mxu0 0.0
    %466 = vmatprep.subr.mxu0 0.0
    %467 = vmatpush1.msra.mxu0 0.0
    %468 = vmatprep.mubr.f32.mxu0 0.0
    %469 = vmatmul.mubr.f32.gmra.mrb[0].mxu0 %v399
    %v470 = vpop.f32.mrb[0].mxu0
    %v471 = vadd.f32 0.0, %v470
    %v472 = vpop.f32.mrb[0].mxu0
    %473 = vmatprep.mubr.f32.mxu0 0.0
    %474 = vmatmul.mubr.f32.gmra.mrb[0].mxu0 %v402
    %v475 = vpop.f32.mrb[0].mxu0
    %v476 = vadd.f32 0.0, %v475
    %v477 = vpop.f32.mrb[0].mxu0
    %478 = vdwg.mxu0
    %479 = vrot.lane.b32.xlu0 %v200, 96
    %v480 = vpop.permute.xlu0 %479
    %481 = vrot.lane.b32.xlu0 %v206, 96
    %v482 = vpop.permute.xlu0 %481
    %483 = vrot.lane.b32.xlu0 %v202, 96
    %v484 = vpop.permute.xlu0 %483
    %485 = vrot.lane.b32.xlu0 %v208, 96
    %v486 = vpop.permute.xlu0 %485
    %v487 = vsel %vm285, %v480, 0
    %v489 = vsel %vm285, %v482, 0
    %v491 = vsel %vm285, %v484, 0
    %v493 = vsel %vm285, %v486, 0
    %495 = vmatprep.subr.mxu0 0.0
    %496 = vmatpush1.xpose.msra.mxu0 %v491
    %497 = vmatprep.subr.mxu0 0.0
    %498 = vmatpush1.xpose.msra.mxu0 %v493
    %499 = vmatprep.subr.mxu0 0.0
    %500 = vmatpush1.xpose.msra.mxu0 0.0
    %501 = vmatprep.subr.mxu0 0.0
    %502 = vmatpush1.xpose.msra.mxu0 0.0
    %503 = vmatprep.subr.mxu0 0.0
    %504 = vmatpush1.xpose.msra.mxu0 0.0
    %505 = vmatprep.subr.mxu0 0.0
    %506 = vmatpush1.xpose.msra.mxu0 0.0
    %507 = vmatprep.subr.mxu0 0.0
    %508 = vmatpush1.xpose.msra.mxu0 0.0
    %509 = vmatprep.subr.mxu0 0.0
    %510 = vmatpush1.xpose.msra.mxu0 0.0
    %511 = vmatprep.subr.mxu0 0.0
    %512 = vmatpush1.xpose.msra.mxu0 0.0
    %513 = vmatprep.subr.mxu0 0.0
    %514 = vmatpush1.xpose.msra.mxu0 0.0
    %515 = vmatprep.subr.mxu0 0.0
    %516 = vmatpush1.xpose.msra.mxu0 0.0
    %517 = vmatprep.subr.mxu0 0.0
    %518 = vmatpush1.xpose.msra.mxu0 0.0
    %519 = vmatprep.subr.mxu0 0.0
    %520 = vmatpush1.xpose.msra.mxu0 0.0
    %521 = vmatprep.subr.mxu0 0.0
    %522 = vmatpush1.xpose.msra.mxu0 0.0
    %523 = vmatprep.subr.mxu0 0.0
    %524 = vmatpush1.xpose.msra.mxu0 0.0
    %525 = vmatprep.subr.mxu0 0.0
    %526 = vmatpush1.xpose.msra.mxu0 0.0
    %527 = vmatprep.subr.mxu0 0.0
    %528 = vmatpush1.xpose.msra.mxu0 0.0
    %529 = vmatprep.subr.mxu0 0.0
    %530 = vmatpush1.xpose.msra.mxu0 0.0
    %531 = vmatprep.subr.mxu0 0.0
    %532 = vmatpush1.xpose.msra.mxu0 0.0
    %533 = vmatprep.subr.mxu0 0.0
    %534 = vmatpush1.xpose.msra.mxu0 0.0
    %535 = vmatprep.subr.mxu0 0.0
    %536 = vmatpush1.xpose.msra.mxu0 0.0
    %537 = vmatprep.subr.mxu0 0.0
    %538 = vmatpush1.xpose.msra.mxu0 0.0
    %539 = vmatprep.subr.mxu0 0.0
    %540 = vmatpush1.xpose.msra.mxu0 0.0
    %541 = vmatprep.subr.mxu0 0.0
    %542 = vmatpush1.xpose.msra.mxu0 0.0
    %543 = vmatprep.subr.mxu0 0.0
    %544 = vmatpush1.xpose.msra.mxu0 0.0
    %545 = vmatprep.subr.mxu0 0.0
    %546 = vmatpush1.xpose.msra.mxu0 0.0
    %547 = vmatprep.subr.mxu0 0.0
    %548 = vmatpush1.xpose.msra.mxu0 0.0
    %549 = vmatprep.subr.mxu0 0.0
    %550 = vmatpush1.xpose.msra.mxu0 0.0
    %551 = vmatprep.subr.mxu0 0.0
    %552 = vmatpush1.xpose.msra.mxu0 0.0
    %553 = vmatprep.subr.mxu0 0.0
    %554 = vmatpush1.xpose.msra.mxu0 0.0
    %555 = vmatprep.subr.mxu0 0.0
    %556 = vmatpush1.xpose.msra.mxu0 0.0
    %557 = vmatprep.subr.mxu0 0.0
    %558 = vmatpush1.xpose.msra.mxu0 0.0
    %559 = vmatprep.mubr.f32.mxu0 0.0
    %560 = vmatmul.mubr.f32.gmra.mrb[0].mxu0 %v487
    %v561 = vpop.f32.mrb[0].mxu0
    %v562 = vadd.f32 0.0, %v561
    %v563 = vpop.f32.mrb[0].mxu0
    %564 = vmatprep.mubr.f32.mxu0 0.0
    %565 = vmatmul.mubr.f32.gmra.mrb[0].mxu0 %v489
    %v566 = vpop.f32.mrb[0].mxu0
    %v567 = vadd.f32 0.0, %v566
    %v568 = vpop.f32.mrb[0].mxu0
    %569 = vdwg.mxu0
    %v570 = vsel %vm129, %v562, -inf
    %v571 = vsel %vm130, %v567, -inf
    %v572 = vsel %vm375, %v570, -inf
    %573 = vmax.xlane.f32.xlu0 %v572
    %v574 = vpop.xlane.xlu0 %573
    %v575 = vsel %vm375, %v571, -inf
    %576 = vmax.xlane.f32.xlu0 %v575
    %v577 = vpop.xlane.xlu0 %576
    %v578 = vsub.f32 %v570, %v574
    %v579 = vsub.f32 %v571, %v577
    %v580 = vmul.f32 %v578, 1.442695
    %v581 = vpow.pop %v580
    %v582 = vmul.f32 %v579, 1.442695
    %v583 = vpow.pop %v582
    %v584 = vsel %vm375, %v581, 0.0
    %585 = vadd.xlane.f32.xlu0 %v584
    %v586 = vpop.xlane.xlu0 %585
    %v587 = vsel %vm375, %v583, 0.0
    %588 = vadd.xlane.f32.xlu0 %v587
    %v589 = vpop.xlane.xlu0 %588
    %v590 = vrcp.pop %v586
    %v591 = vrcp.pop %v589
    %v592 = vmul.f32 %v581, %v590
    %v593 = vmul.f32 %v583, %v591
    %596 = vrot.lane.b32.xlu0 %v277, 96
    %v597 = vpop.permute.xlu0 %596
    %598 = vrot.lane.b32.xlu0 %v282, 96
    %v599 = vpop.permute.xlu0 %598
    %v603 = vsel %vm375, %v592, 0
    %v606 = vsel %vm375, %v593, 0
    %608 = vmatprep.subr.mxu0 0.0
    %609 = vmatpush1.msra.mxu0 %v597
    %610 = vmatprep.subr.mxu0 0.0
    %611 = vmatpush1.msra.mxu0 %v599
    %612 = vmatprep.subr.mxu0 0.0
    %613 = vmatpush1.msra.mxu0 0.0
    %614 = vmatprep.subr.mxu0 0.0
    %615 = vmatpush1.msra.mxu0 0.0
    %616 = vmatprep.subr.mxu0 0.0
    %617 = vmatpush1.msra.mxu0 0.0
    %618 = vmatprep.subr.mxu0 0.0
    %619 = vmatpush1.msra.mxu0 0.0
    %620 = vmatprep.subr.mxu0 0.0
    %621 = vmatpush1.msra.mxu0 0.0
    %622 = vmatprep.subr.mxu0 0.0
    %623 = vmatpush1.msra.mxu0 0.0
    %624 = vmatprep.subr.mxu0 0.0
    %625 = vmatpush1.msra.mxu0 0.0
    %626 = vmatprep.subr.mxu0 0.0
    %627 = vmatpush1.msra.mxu0 0.0
    %628 = vmatprep.subr.mxu0 0.0
    %629 = vmatpush1.msra.mxu0 0.0
    %630 = vmatprep.subr.mxu0 0.0
    %631 = vmatpush1.msra.mxu0 0.0
    %632 = vmatprep.subr.mxu0 0.0
    %633 = vmatpush1.msra.mxu0 0.0
    %634 = vmatprep.subr.mxu0 0.0
    %635 = vmatpush1.msra.mxu0 0.0
    %636 = vmatprep.subr.mxu0 0.0
    %637 = vmatpush1.msra.mxu0 0.0
    %638 = vmatprep.subr.mxu0 0.0
    %639 = vmatpush1.msra.mxu0 0.0
    %640 = vmatprep.subr.mxu0 0.0
    %641 = vmatpush1.msra.mxu0 0.0
    %642 = vmatprep.subr.mxu0 0.0
    %643 = vmatpush1.msra.mxu0 0.0
    %644 = vmatprep.subr.mxu0 0.0
    %645 = vmatpush1.msra.mxu0 0.0
    %646 = vmatprep.subr.mxu0 0.0
    %647 = vmatpush1.msra.mxu0 0.0
    %648 = vmatprep.subr.mxu0 0.0
    %649 = vmatpush1.msra.mxu0 0.0
    %650 = vmatprep.subr.mxu0 0.0
    %651 = vmatpush1.msra.mxu0 0.0
    %652 = vmatprep.subr.mxu0 0.0
    %653 = vmatpush1.msra.mxu0 0.0
    %654 = vmatprep.subr.mxu0 0.0
    %655 = vmatpush1.msra.mxu0 0.0
    %656 = vmatprep.subr.mxu0 0.0
    %657 = vmatpush1.msra.mxu0 0.0
    %658 = vmatprep.subr.mxu0 0.0
    %659 = vmatpush1.msra.mxu0 0.0
    %660 = vmatprep.subr.mxu0 0.0
    %661 = vmatpush1.msra.mxu0 0.0
    %662 = vmatprep.subr.mxu0 0.0
    %663 = vmatpush1.msra.mxu0 0.0
    %664 = vmatprep.subr.mxu0 0.0
    %665 = vmatpush1.msra.mxu0 0.0
    %666 = vmatprep.subr.mxu0 0.0
    %667 = vmatpush1.msra.mxu0 0.0
    %668 = vmatprep.subr.mxu0 0.0
    %669 = vmatpush1.msra.mxu0 0.0
    %670 = vmatprep.subr.mxu0 0.0
    %671 = vmatpush1.msra.mxu0 0.0
    %672 = vmatprep.mubr.f32.mxu0 0.0
    %673 = vmatmul.mubr.f32.gmra.mrb[0].mxu0 %v603
    %v674 = vpop.f32.mrb[0].mxu0
    %v675 = vadd.f32 0.0, %v674
    %v676 = vpop.f32.mrb[0].mxu0
    %677 = vmatprep.mubr.f32.mxu0 0.0
    %678 = vmatmul.mubr.f32.gmra.mrb[0].mxu0 %v606
    %v679 = vpop.f32.mrb[0].mxu0
    %v680 = vadd.f32 0.0, %v679
    %v681 = vpop.f32.mrb[0].mxu0
    %682 = vdwg.mxu0
    %683 = vrot.lane.b32.xlu0 %v200, 64
    %v684 = vpop.permute.xlu0 %683
    %685 = vrot.lane.b32.xlu0 %v206, 64
    %v686 = vpop.permute.xlu0 %685
    %687 = vrot.lane.b32.xlu0 %v202, 64
    %v688 = vpop.permute.xlu0 %687
    %689 = vrot.lane.b32.xlu0 %v208, 64
    %v690 = vpop.permute.xlu0 %689
    %v691 = vsel %vm285, %v684, 0
    %v693 = vsel %vm285, %v686, 0
    %v695 = vsel %vm285, %v688, 0
    %v697 = vsel %vm285, %v690, 0
    %699 = vmatprep.subr.mxu0 0.0
    %700 = vmatpush1.xpose.msra.mxu0 %v695
    %701 = vmatprep.subr.mxu0 0.0
    %702 = vmatpush1.xpose.msra.mxu0 %v697
    %703 = vmatprep.subr.mxu0 0.0
    %704 = vmatpush1.xpose.msra.mxu0 0.0
    %705 = vmatprep.subr.mxu0 0.0
    %706 = vmatpush1.xpose.msra.mxu0 0.0
    %707 = vmatprep.subr.mxu0 0.0
    %708 = vmatpush1.xpose.msra.mxu0 0.0
    %709 = vmatprep.subr.mxu0 0.0
    %710 = vmatpush1.xpose.msra.mxu0 0.0
    %711 = vmatprep.subr.mxu0 0.0
    %712 = vmatpush1.xpose.msra.mxu0 0.0
    %713 = vmatprep.subr.mxu0 0.0
    %714 = vmatpush1.xpose.msra.mxu0 0.0
    %715 = vmatprep.subr.mxu0 0.0
    %716 = vmatpush1.xpose.msra.mxu0 0.0
    %717 = vmatprep.subr.mxu0 0.0
    %718 = vmatpush1.xpose.msra.mxu0 0.0
    %719 = vmatprep.subr.mxu0 0.0
    %720 = vmatpush1.xpose.msra.mxu0 0.0
    %721 = vmatprep.subr.mxu0 0.0
    %722 = vmatpush1.xpose.msra.mxu0 0.0
    %723 = vmatprep.subr.mxu0 0.0
    %724 = vmatpush1.xpose.msra.mxu0 0.0
    %725 = vmatprep.subr.mxu0 0.0
    %726 = vmatpush1.xpose.msra.mxu0 0.0
    %727 = vmatprep.subr.mxu0 0.0
    %728 = vmatpush1.xpose.msra.mxu0 0.0
    %729 = vmatprep.subr.mxu0 0.0
    %730 = vmatpush1.xpose.msra.mxu0 0.0
    %731 = vmatprep.subr.mxu0 0.0
    %732 = vmatpush1.xpose.msra.mxu0 0.0
    %733 = vmatprep.subr.mxu0 0.0
    %734 = vmatpush1.xpose.msra.mxu0 0.0
    %735 = vmatprep.subr.mxu0 0.0
    %736 = vmatpush1.xpose.msra.mxu0 0.0
    %737 = vmatprep.subr.mxu0 0.0
    %738 = vmatpush1.xpose.msra.mxu0 0.0
    %739 = vmatprep.subr.mxu0 0.0
    %740 = vmatpush1.xpose.msra.mxu0 0.0
    %741 = vmatprep.subr.mxu0 0.0
    %742 = vmatpush1.xpose.msra.mxu0 0.0
    %743 = vmatprep.subr.mxu0 0.0
    %744 = vmatpush1.xpose.msra.mxu0 0.0
    %745 = vmatprep.subr.mxu0 0.0
    %746 = vmatpush1.xpose.msra.mxu0 0.0
    %747 = vmatprep.subr.mxu0 0.0
    %748 = vmatpush1.xpose.msra.mxu0 0.0
    %749 = vmatprep.subr.mxu0 0.0
    %750 = vmatpush1.xpose.msra.mxu0 0.0
    %751 = vmatprep.subr.mxu0 0.0
    %752 = vmatpush1.xpose.msra.mxu0 0.0
    %753 = vmatprep.subr.mxu0 0.0
    %754 = vmatpush1.xpose.msra.mxu0 0.0
    %755 = vmatprep.subr.mxu0 0.0
    %756 = vmatpush1.xpose.msra.mxu0 0.0
    %757 = vmatprep.subr.mxu0 0.0
    %758 = vmatpush1.xpose.msra.mxu0 0.0
    %759 = vmatprep.subr.mxu0 0.0
    %760 = vmatpush1.xpose.msra.mxu0 0.0
    %761 = vmatprep.subr.mxu0 0.0
    %762 = vmatpush1.xpose.msra.mxu0 0.0
    %763 = vmatprep.mubr.f32.mxu0 0.0
    %764 = vmatmul.mubr.f32.gmra.mrb[0].mxu0 %v691
    %v765 = vpop.f32.mrb[0].mxu0
    %v766 = vadd.f32 0.0, %v765
    %v767 = vpop.f32.mrb[0].mxu0
    %768 = vmatprep.mubr.f32.mxu0 0.0
    %769 = vmatmul.mubr.f32.gmra.mrb[0].mxu0 %v693
    %v770 = vpop.f32.mrb[0].mxu0
    %v771 = vadd.f32 0.0, %v770
    %v772 = vpop.f32.mrb[0].mxu0
    %773 = vdwg.mxu0
    %v774 = vsel %vm129, %v766, -inf
    %v775 = vsel %vm130, %v771, -inf
    %v776 = vsel %vm375, %v774, -inf
    %777 = vmax.xlane.f32.xlu0 %v776
    %v778 = vpop.xlane.xlu0 %777
    %v779 = vsel %vm375, %v775, -inf
    %780 = vmax.xlane.f32.xlu0 %v779
    %v781 = vpop.xlane.xlu0 %780
    %v782 = vsub.f32 %v774, %v778
    %v783 = vsub.f32 %v775, %v781
    %v784 = vmul.f32 %v782, 1.442695
    %v785 = vpow.pop %v784
    %v786 = vmul.f32 %v783, 1.442695
    %v787 = vpow.pop %v786
    %v788 = vsel %vm375, %v785, 0.0
    %789 = vadd.xlane.f32.xlu0 %v788
    %v790 = vpop.xlane.xlu0 %789
    %v791 = vsel %vm375, %v787, 0.0
    %792 = vadd.xlane.f32.xlu0 %v791
    %v793 = vpop.xlane.xlu0 %792
    %v794 = vrcp.pop %v790
    %v795 = vrcp.pop %v793
    %v796 = vmul.f32 %v785, %v794
    %v797 = vmul.f32 %v787, %v795
    %798 = vrot.lane.b32.xlu0 %v277, 64
    %v799 = vpop.permute.xlu0 %798
    %800 = vrot.lane.b32.xlu0 %v282, 64
    %v801 = vpop.permute.xlu0 %800
    %v805 = vsel %vm375, %v796, 0
    %v808 = vsel %vm375, %v797, 0
    %810 = vmatprep.subr.mxu0 0.0
    %811 = vmatpush1.msra.mxu0 %v799
    %812 = vmatprep.subr.mxu0 0.0
    %813 = vmatpush1.msra.mxu0 %v801
    %814 = vmatprep.subr.mxu0 0.0
    %815 = vmatpush1.msra.mxu0 0.0
    %816 = vmatprep.subr.mxu0 0.0
    %817 = vmatpush1.msra.mxu0 0.0
    %818 = vmatprep.subr.mxu0 0.0
    %819 = vmatpush1.msra.mxu0 0.0
    %820 = vmatprep.subr.mxu0 0.0
    %821 = vmatpush1.msra.mxu0 0.0
    %822 = vmatprep.subr.mxu0 0.0
    %823 = vmatpush1.msra.mxu0 0.0
    %824 = vmatprep.subr.mxu0 0.0
    %825 = vmatpush1.msra.mxu0 0.0
    %826 = vmatprep.subr.mxu0 0.0
    %827 = vmatpush1.msra.mxu0 0.0
    %828 = vmatprep.subr.mxu0 0.0
    %829 = vmatpush1.msra.mxu0 0.0
    %830 = vmatprep.subr.mxu0 0.0
    %831 = vmatpush1.msra.mxu0 0.0
    %832 = vmatprep.subr.mxu0 0.0
    %833 = vmatpush1.msra.mxu0 0.0
    %834 = vmatprep.subr.mxu0 0.0
    %835 = vmatpush1.msra.mxu0 0.0
    %836 = vmatprep.subr.mxu0 0.0
    %837 = vmatpush1.msra.mxu0 0.0
    %838 = vmatprep.subr.mxu0 0.0
    %839 = vmatpush1.msra.mxu0 0.0
    %840 = vmatprep.subr.mxu0 0.0
    %841 = vmatpush1.msra.mxu0 0.0
    %842 = vmatprep.subr.mxu0 0.0
    %843 = vmatpush1.msra.mxu0 0.0
    %844 = vmatprep.subr.mxu0 0.0
    %845 = vmatpush1.msra.mxu0 0.0
    %846 = vmatprep.subr.mxu0 0.0
    %847 = vmatpush1.msra.mxu0 0.0
    %848 = vmatprep.subr.mxu0 0.0
    %849 = vmatpush1.msra.mxu0 0.0
    %850 = vmatprep.subr.mxu0 0.0
    %851 = vmatpush1.msra.mxu0 0.0
    %852 = vmatprep.subr.mxu0 0.0
    %853 = vmatpush1.msra.mxu0 0.0
    %854 = vmatprep.subr.mxu0 0.0
    %855 = vmatpush1.msra.mxu0 0.0
    %856 = vmatprep.subr.mxu0 0.0
    %857 = vmatpush1.msra.mxu0 0.0
    %858 = vmatprep.subr.mxu0 0.0
    %859 = vmatpush1.msra.mxu0 0.0
    %860 = vmatprep.subr.mxu0 0.0
    %861 = vmatpush1.msra.mxu0 0.0
    %862 = vmatprep.subr.mxu0 0.0
    %863 = vmatpush1.msra.mxu0 0.0
    %864 = vmatprep.subr.mxu0 0.0
    %865 = vmatpush1.msra.mxu0 0.0
    %866 = vmatprep.subr.mxu0 0.0
    %867 = vmatpush1.msra.mxu0 0.0
    %868 = vmatprep.subr.mxu0 0.0
    %869 = vmatpush1.msra.mxu0 0.0
    %870 = vmatprep.subr.mxu0 0.0
    %871 = vmatpush1.msra.mxu0 0.0
    %872 = vmatprep.subr.mxu0 0.0
    %873 = vmatpush1.msra.mxu0 0.0
    %874 = vmatprep.mubr.f32.mxu0 0.0
    %875 = vmatmul.mubr.f32.gmra.mrb[0].mxu0 %v805
    %v876 = vpop.f32.mrb[0].mxu0
    %v877 = vadd.f32 0.0, %v876
    %v878 = vpop.f32.mrb[0].mxu0
    %879 = vmatprep.mubr.f32.mxu0 0.0
    %880 = vmatmul.mubr.f32.gmra.mrb[0].mxu0 %v808
    %v881 = vpop.f32.mrb[0].mxu0
    %v882 = vadd.f32 0.0, %v881
    %v883 = vpop.f32.mrb[0].mxu0
    %884 = vdwg.mxu0
    %885 = vrot.lane.b32.xlu0 %v200, 32
    %v886 = vpop.permute.xlu0 %885
    %887 = vrot.lane.b32.xlu0 %v206, 32
    %v888 = vpop.permute.xlu0 %887
    %889 = vrot.lane.b32.xlu0 %v202, 32
    %v890 = vpop.permute.xlu0 %889
    %891 = vrot.lane.b32.xlu0 %v208, 32
    %v892 = vpop.permute.xlu0 %891
    %v893 = vsel %vm285, %v886, 0
    %v895 = vsel %vm285, %v888, 0
    %v897 = vsel %vm285, %v890, 0
    %v899 = vsel %vm285, %v892, 0
    %901 = vmatprep.subr.mxu0 0.0
    %902 = vmatpush1.xpose.msra.mxu0 %v897
    %903 = vmatprep.subr.mxu0 0.0
    %904 = vmatpush1.xpose.msra.mxu0 %v899
    %905 = vmatprep.subr.mxu0 0.0
    %906 = vmatpush1.xpose.msra.mxu0 0.0
    %907 = vmatprep.subr.mxu0 0.0
    %908 = vmatpush1.xpose.msra.mxu0 0.0
    %909 = vmatprep.subr.mxu0 0.0
    %910 = vmatpush1.xpose.msra.mxu0 0.0
    %911 = vmatprep.subr.mxu0 0.0
    %912 = vmatpush1.xpose.msra.mxu0 0.0
    %913 = vmatprep.subr.mxu0 0.0
    %914 = vmatpush1.xpose.msra.mxu0 0.0
    %915 = vmatprep.subr.mxu0 0.0
    %916 = vmatpush1.xpose.msra.mxu0 0.0
    %917 = vmatprep.subr.mxu0 0.0
    %918 = vmatpush1.xpose.msra.mxu0 0.0
    %919 = vmatprep.subr.mxu0 0.0
    %920 = vmatpush1.xpose.msra.mxu0 0.0
    %921 = vmatprep.subr.mxu0 0.0
    %922 = vmatpush1.xpose.msra.mxu0 0.0
    %923 = vmatprep.subr.mxu0 0.0
    %924 = vmatpush1.xpose.msra.mxu0 0.0
    %925 = vmatprep.subr.mxu0 0.0
    %926 = vmatpush1.xpose.msra.mxu0 0.0
    %927 = vmatprep.subr.mxu0 0.0
    %928 = vmatpush1.xpose.msra.mxu0 0.0
    %929 = vmatprep.subr.mxu0 0.0
    %930 = vmatpush1.xpose.msra.mxu0 0.0
    %931 = vmatprep.subr.mxu0 0.0
    %932 = vmatpush1.xpose.msra.mxu0 0.0
    %933 = vmatprep.subr.mxu0 0.0
    %934 = vmatpush1.xpose.msra.mxu0 0.0
    %935 = vmatprep.subr.mxu0 0.0
    %936 = vmatpush1.xpose.msra.mxu0 0.0
    %937 = vmatprep.subr.mxu0 0.0
    %938 = vmatpush1.xpose.msra.mxu0 0.0
    %939 = vmatprep.subr.mxu0 0.0
    %940 = vmatpush1.xpose.msra.mxu0 0.0
    %941 = vmatprep.subr.mxu0 0.0
    %942 = vmatpush1.xpose.msra.mxu0 0.0
    %943 = vmatprep.subr.mxu0 0.0
    %944 = vmatpush1.xpose.msra.mxu0 0.0
    %945 = vmatprep.subr.mxu0 0.0
    %946 = vmatpush1.xpose.msra.mxu0 0.0
    %947 = vmatprep.subr.mxu0 0.0
    %948 = vmatpush1.xpose.msra.mxu0 0.0
    %949 = vmatprep.subr.mxu0 0.0
    %950 = vmatpush1.xpose.msra.mxu0 0.0
    %951 = vmatprep.subr.mxu0 0.0
    %952 = vmatpush1.xpose.msra.mxu0 0.0
    %953 = vmatprep.subr.mxu0 0.0
    %954 = vmatpush1.xpose.msra.mxu0 0.0
    %955 = vmatprep.subr.mxu0 0.0
    %956 = vmatpush1.xpose.msra.mxu0 0.0
    %957 = vmatprep.subr.mxu0 0.0
    %958 = vmatpush1.xpose.msra.mxu0 0.0
    %959 = vmatprep.subr.mxu0 0.0
    %960 = vmatpush1.xpose.msra.mxu0 0.0
    %961 = vmatprep.subr.mxu0 0.0
    %962 = vmatpush1.xpose.msra.mxu0 0.0
    %963 = vmatprep.subr.mxu0 0.0
    %964 = vmatpush1.xpose.msra.mxu0 0.0
    %965 = vmatprep.mubr.f32.mxu0 0.0
    %966 = vmatmul.mubr.f32.gmra.mrb[0].mxu0 %v893
    %v967 = vpop.f32.mrb[0].mxu0
    %v968 = vadd.f32 0.0, %v967
    %v969 = vpop.f32.mrb[0].mxu0
    %970 = vmatprep.mubr.f32.mxu0 0.0
    %971 = vmatmul.mubr.f32.gmra.mrb[0].mxu0 %v895
    %v972 = vpop.f32.mrb[0].mxu0
    %v973 = vadd.f32 0.0, %v972
    %v974 = vpop.f32.mrb[0].mxu0
    %975 = vdwg.mxu0
    %v976 = vsel %vm129, %v968, -inf
    %v977 = vsel %vm130, %v973, -inf
    %v978 = vsel %vm375, %v976, -inf
    %979 = vmax.xlane.f32.xlu0 %v978
    %v980 = vpop.xlane.xlu0 %979
    %v981 = vsel %vm375, %v977, -inf
    %982 = vmax.xlane.f32.xlu0 %v981
    %v983 = vpop.xlane.xlu0 %982
    %v984 = vsub.f32 %v976, %v980
    %v985 = vsub.f32 %v977, %v983
    %v986 = vmul.f32 %v984, 1.442695
    %v987 = vpow.pop %v986
    %v988 = vmul.f32 %v985, 1.442695
    %v989 = vpow.pop %v988
    %v990 = vsel %vm375, %v987, 0.0
    %991 = vadd.xlane.f32.xlu0 %v990
    %v992 = vpop.xlane.xlu0 %991
    %v993 = vsel %vm375, %v989, 0.0
    %994 = vadd.xlane.f32.xlu0 %v993
    %v995 = vpop.xlane.xlu0 %994
    %v996 = vrcp.pop %v992
    %v997 = vrcp.pop %v995
    %v998 = vmul.f32 %v987, %v996
    %v999 = vmul.f32 %v989, %v997
    %1000 = vrot.lane.b32.xlu0 %v277, 32
    %v1001 = vpop.permute.xlu0 %1000
    %1002 = vrot.lane.b32.xlu0 %v282, 32
    %v1003 = vpop.permute.xlu0 %1002
    %v1007 = vsel %vm375, %v998, 0
    %v1010 = vsel %vm375, %v999, 0
    %1012 = vmatprep.subr.mxu0 0.0
    %1013 = vmatpush1.msra.mxu0 %v1001
    %1014 = vmatprep.subr.mxu0 0.0
    %1015 = vmatpush1.msra.mxu0 %v1003
    %1016 = vmatprep.subr.mxu0 0.0
    %1017 = vmatpush1.msra.mxu0 0.0
    %1018 = vmatprep.subr.mxu0 0.0
    %1019 = vmatpush1.msra.mxu0 0.0
    %1020 = vmatprep.subr.mxu0 0.0
    %1021 = vmatpush1.msra.mxu0 0.0
    %1022 = vmatprep.subr.mxu0 0.0
    %1023 = vmatpush1.msra.mxu0 0.0
    %1024 = vmatprep.subr.mxu0 0.0
    %1025 = vmatpush1.msra.mxu0 0.0
    %1026 = vmatprep.subr.mxu0 0.0
    %1027 = vmatpush1.msra.mxu0 0.0
    %1028 = vmatprep.subr.mxu0 0.0
    %1029 = vmatpush1.msra.mxu0 0.0
    %1030 = vmatprep.subr.mxu0 0.0
    %1031 = vmatpush1.msra.mxu0 0.0
    %1032 = vmatprep.subr.mxu0 0.0
    %1033 = vmatpush1.msra.mxu0 0.0
    %1034 = vmatprep.subr.mxu0 0.0
    %1035 = vmatpush1.msra.mxu0 0.0
    %1036 = vmatprep.subr.mxu0 0.0
    %1037 = vmatpush1.msra.mxu0 0.0
    %1038 = vmatprep.subr.mxu0 0.0
    %1039 = vmatpush1.msra.mxu0 0.0
    %1040 = vmatprep.subr.mxu0 0.0
    %1041 = vmatpush1.msra.mxu0 0.0
    %1042 = vmatprep.subr.mxu0 0.0
    %1043 = vmatpush1.msra.mxu0 0.0
    %1044 = vmatprep.subr.mxu0 0.0
    %1045 = vmatpush1.msra.mxu0 0.0
    %1046 = vmatprep.subr.mxu0 0.0
    %1047 = vmatpush1.msra.mxu0 0.0
    %1048 = vmatprep.subr.mxu0 0.0
    %1049 = vmatpush1.msra.mxu0 0.0
    %1050 = vmatprep.subr.mxu0 0.0
    %1051 = vmatpush1.msra.mxu0 0.0
    %1052 = vmatprep.subr.mxu0 0.0
    %1053 = vmatpush1.msra.mxu0 0.0
    %1054 = vmatprep.subr.mxu0 0.0
    %1055 = vmatpush1.msra.mxu0 0.0
    %1056 = vmatprep.subr.mxu0 0.0
    %1057 = vmatpush1.msra.mxu0 0.0
    %1058 = vmatprep.subr.mxu0 0.0
    %1059 = vmatpush1.msra.mxu0 0.0
    %1060 = vmatprep.subr.mxu0 0.0
    %1061 = vmatpush1.msra.mxu0 0.0
    %1062 = vmatprep.subr.mxu0 0.0
    %1063 = vmatpush1.msra.mxu0 0.0
    %1064 = vmatprep.subr.mxu0 0.0
    %1065 = vmatpush1.msra.mxu0 0.0
    %1066 = vmatprep.subr.mxu0 0.0
    %1067 = vmatpush1.msra.mxu0 0.0
    %1068 = vmatprep.subr.mxu0 0.0
    %1069 = vmatpush1.msra.mxu0 0.0
    %1070 = vmatprep.subr.mxu0 0.0
    %1071 = vmatpush1.msra.mxu0 0.0
    %1072 = vmatprep.subr.mxu0 0.0
    %1073 = vmatpush1.msra.mxu0 0.0
    %1074 = vmatprep.subr.mxu0 0.0
    %1075 = vmatpush1.msra.mxu0 0.0
    %1076 = vmatprep.mubr.f32.mxu0 0.0
    %1077 = vmatmul.mubr.f32.gmra.mrb[0].mxu0 %v1007
    %v1078 = vpop.f32.mrb[0].mxu0
    %v1079 = vadd.f32 0.0, %v1078
    %v1080 = vpop.f32.mrb[0].mxu0
    %1081 = vmatprep.mubr.f32.mxu0 0.0
    %1082 = vmatmul.mubr.f32.gmra.mrb[0].mxu0 %v1010
    %v1083 = vpop.f32.mrb[0].mxu0
    %v1084 = vadd.f32 0.0, %v1083
    %v1085 = vpop.f32.mrb[0].mxu0
    %1086 = vdwg.mxu0
    %1089 = vrot.lane.b32.xlu0 %v675, 32
    %v1090 = vpop.permute.xlu0 %1089
    %1091 = vrot.lane.b32.xlu0 %v680, 32
    %v1092 = vpop.permute.xlu0 %1091
    %1097 = vrot.lane.b32.xlu0 %v877, 64
    %v1098 = vpop.permute.xlu0 %1097
    %1099 = vrot.lane.b32.xlu0 %v882, 64
    %v1100 = vpop.permute.xlu0 %1099
    %1105 = vrot.lane.b32.xlu0 %v1079, 96
    %v1106 = vpop.permute.xlu0 %1105
    %1107 = vrot.lane.b32.xlu0 %v1084, 96
    %v1108 = vpop.permute.xlu0 %1107
    %v1111 = vsel %vm285, %v471, %v1090
    %v1112 = vsel %vm285, %v476, %v1092
    %vm1113 = vcmask 523264
    %v1114 = vsel %vm1113, %v1111, %v1098
    %v1115 = vsel %vm1113, %v1112, %v1100
    %vm1116 = vcmask 785408
    %v1117 = vsel %vm1116, %v1114, %v1106
    %v1118 = vsel %vm1116, %v1115, %v1108
    %v1120 = vlaneseq
    %v1121 = vshrl.u32 %v1120, 7
    %v1122 = vsub.s32 0, %v1121
    %v1123 = vrot.slane %v123, %v1122
    %1125 = vmatprep.subr.mxu0 0.0
    %1126 = vmatpush1.msra.mxu0 %v107
    %1127 = vmatprep.subr.mxu0 0.0
    %1128 = vmatpush1.msra.mxu0 %v108
    %1129 = vmatprep.subr.mxu0 0.0
    %1130 = vmatpush1.msra.mxu0 %v109
    %1131 = vmatprep.subr.mxu0 0.0
    %1132 = vmatpush1.msra.mxu0 %v110
    %1133 = vmatprep.subr.mxu0 0.0
    %1134 = vmatpush1.msra.mxu0 %v111
    %1135 = vmatprep.subr.mxu0 0.0
    %1136 = vmatpush1.msra.mxu0 %v112
    %1137 = vmatprep.subr.mxu0 0.0
    %1138 = vmatpush1.msra.mxu0 %v113
    %1139 = vmatprep.subr.mxu0 0.0
    %1140 = vmatpush1.msra.mxu0 %v114
    %1141 = vmatprep.subr.mxu0 0.0
    %1142 = vmatpush1.msra.mxu0 %v115
    %1143 = vmatprep.subr.mxu0 0.0
    %1144 = vmatpush1.msra.mxu0 %v116
    %1145 = vmatprep.subr.mxu0 0.0
    %1146 = vmatpush1.msra.mxu0 %v117
    %1147 = vmatprep.subr.mxu0 0.0
    %1148 = vmatpush1.msra.mxu0 %v118
    %1149 = vmatprep.subr.mxu0 0.0
    %1150 = vmatpush1.msra.mxu0 %v119
    %1151 = vmatprep.subr.mxu0 0.0
    %1152 = vmatpush1.msra.mxu0 %v120
    %1153 = vmatprep.subr.mxu0 0.0
    %1154 = vmatpush1.msra.mxu0 %v121
    %1155 = vmatprep.subr.mxu0 0.0
    %1156 = vmatpush1.msra.mxu0 %v122
    %1157 = vmatprep.subr.mxu0 0.0
    %1158 = vmatpush1.msra.mxu0 0.0
    %1159 = vmatprep.subr.mxu0 0.0
    %1160 = vmatpush1.msra.mxu0 0.0
    %1161 = vmatprep.subr.mxu0 0.0
    %1162 = vmatpush1.msra.mxu0 0.0
    %1163 = vmatprep.subr.mxu0 0.0
    %1164 = vmatpush1.msra.mxu0 0.0
    %1165 = vmatprep.subr.mxu0 0.0
    %1166 = vmatpush1.msra.mxu0 0.0
    %1167 = vmatprep.subr.mxu0 0.0
    %1168 = vmatpush1.msra.mxu0 0.0
    %1169 = vmatprep.subr.mxu0 0.0
    %1170 = vmatpush1.msra.mxu0 0.0
    %1171 = vmatprep.subr.mxu0 0.0
    %1172 = vmatpush1.msra.mxu0 0.0
    %1173 = vmatprep.subr.mxu0 0.0
    %1174 = vmatpush1.msra.mxu0 0.0
    %1175 = vmatprep.subr.mxu0 0.0
    %1176 = vmatpush1.msra.mxu0 0.0
    %1177 = vmatprep.subr.mxu0 0.0
    %1178 = vmatpush1.msra.mxu0 0.0
    %1179 = vmatprep.subr.mxu0 0.0
    %1180 = vmatpush1.msra.mxu0 0.0
    %1181 = vmatprep.subr.mxu0 0.0
    %1182 = vmatpush1.msra.mxu0 0.0
    %1183 = vmatprep.subr.mxu0 0.0
    %1184 = vmatpush1.msra.mxu0 0.0
    %1185 = vmatprep.subr.mxu0 0.0
    %1186 = vmatpush1.msra.mxu0 0.0
    %1187 = vmatprep.subr.mxu0 0.0
    %1188 = vmatpush1.msra.mxu0 0.0
    %1189 = vmatprep.mubr.f32.mxu0 0.0
    %1190 = vmatmul.mubr.f32.gmra.mrb[0].mxu0 %v1117
    %v1191 = vpop.f32.mrb[0].mxu0
    %v1192 = vadd.f32 %v1123, %v1191
    %v1193 = vpop.f32.mrb[0].mxu0
    %1194 = vmatprep.mubr.f32.mxu0 0.0
    %1195 = vmatmul.mubr.f32.gmra.mrb[0].mxu0 %v1118
    %v1196 = vpop.f32.mrb[0].mxu0
    %v1197 = vadd.f32 %v1123, %v1196
    %v1198 = vpop.f32.mrb[0].mxu0
    %1199 = vdwg.mxu0
    %1200 = vst [vmem:[#allocation8] sm:$0xff] %v1192
    %1201 = vst [vmem:[#allocation8 + $0x8] sm:$0xff] %v1197
    %s1202 = scalar_lea.vmem [#allocation2], 16
    %v1203 = vld [vmem:[%s1202] sm:$0xff]
    %v1204 = vld [vmem:[%s1202 + $0x8] sm:$0xff]
    %1205 = vmatprep.subr.mxu0 %v60
    %1206 = vmatpush1.msra.mxu0 %v59
    %1207 = vmatprep.subr.mxu0 %v63
    %1208 = vmatpush1.msra.mxu0 %v62
    %1209 = vmatprep.subr.mxu0 %v66
    %1210 = vmatpush1.msra.mxu0 %v65
    %1211 = vmatprep.subr.mxu0 %v69
    %1212 = vmatpush1.msra.mxu0 %v68
    %1213 = vmatprep.subr.mxu0 %v72
    %1214 = vmatpush1.msra.mxu0 %v71
    %1215 = vmatprep.subr.mxu0 %v75
    %1216 = vmatpush1.msra.mxu0 %v74
    %1217 = vmatprep.subr.mxu0 %v78
    %1218 = vmatpush1.msra.mxu0 %v77
    %1219 = vmatprep.subr.mxu0 %v81
    %1220 = vmatpush1.msra.mxu0 %v80
    %1221 = vmatprep.subr.mxu0 %v84
    %1222 = vmatpush1.msra.mxu0 %v83
    %1223 = vmatprep.subr.mxu0 %v87
    %1224 = vmatpush1.msra.mxu0 %v86
    %1225 = vmatprep.subr.mxu0 %v90
    %1226 = vmatpush1.msra.mxu0 %v89
    %1227 = vmatprep.subr.mxu0 %v93
    %1228 = vmatpush1.msra.mxu0 %v92
    %1229 = vmatprep.subr.mxu0 %v96
    %1230 = vmatpush1.msra.mxu0 %v95
    %1231 = vmatprep.subr.mxu0 %v99
    %1232 = vmatpush1.msra.mxu0 %v98
    %1233 = vmatprep.subr.mxu0 %v102
    %1234 = vmatpush1.msra.mxu0 %v101
    %1235 = vmatprep.subr.mxu0 %v105
    %1236 = vmatpush1.msra.mxu0 %v104
    %1237 = vmatprep.subr.mxu0 0.0
    %1238 = vmatpush1.msra.mxu0 0.0
    %1239 = vmatprep.subr.mxu0 0.0
    %1240 = vmatpush1.msra.mxu0 0.0
    %1241 = vmatprep.subr.mxu0 0.0
    %1242 = vmatpush1.msra.mxu0 0.0
    %1243 = vmatprep.subr.mxu0 0.0
    %1244 = vmatpush1.msra.mxu0 0.0
    %1245 = vmatprep.subr.mxu0 0.0
    %1246 = vmatpush1.msra.mxu0 0.0
    %1247 = vmatprep.subr.mxu0 0.0
    %1248 = vmatpush1.msra.mxu0 0.0
    %1249 = vmatprep.subr.mxu0 0.0
    %1250 = vmatpush1.msra.mxu0 0.0
    %1251 = vmatprep.subr.mxu0 0.0
    %1252 = vmatpush1.msra.mxu0 0.0
    %1253 = vmatprep.subr.mxu0 0.0
    %1254 = vmatpush1.msra.mxu0 0.0
    %1255 = vmatprep.subr.mxu0 0.0
    %1256 = vmatpush1.msra.mxu0 0.0
    %1257 = vmatprep.subr.mxu0 0.0
    %1258 = vmatpush1.msra.mxu0 0.0
    %1259 = vmatprep.subr.mxu0 0.0
    %1260 = vmatpush1.msra.mxu0 0.0
    %1261 = vmatprep.subr.mxu0 0.0
    %1262 = vmatpush1.msra.mxu0 0.0
    %1263 = vmatprep.subr.mxu0 0.0
    %1264 = vmatpush1.msra.mxu0 0.0
    %1265 = vmatprep.subr.mxu0 0.0
    %1266 = vmatpush1.msra.mxu0 0.0
    %1267 = vmatprep.subr.mxu0 0.0
    %1268 = vmatpush1.msra.mxu0 0.0
    %1269 = vmatprep.mubr.f32.mxu0 0.0
    %1270 = vmatmul.mubr.f32.gmra.mrb[0].mxu0 %v1203
    %v1271 = vpop.f32.mrb[0].mxu0
    %v1272 = vadd.f32 0.0, %v1271
    %v1273 = vpop.f32.mrb[0].mxu0
    %v1274 = vadd.f32 0.0, %v1273
    %1275 = vmatprep.mubr.f32.mxu0 0.0
    %1276 = vmatmul.mubr.f32.gmra.mrb[0].mxu0 %v1204
    %v1277 = vpop.f32.mrb[0].mxu0
    %v1278 = vadd.f32 0.0, %v1277
    %v1279 = vpop.f32.mrb[0].mxu0
    %v1280 = vadd.f32 0.0, %v1279
    %1281 = vdwg.mxu0
    %1282 = vmatprep.subr.mxu0 0.0
    %1283 = vmatpush1.msra.mxu0 %v61
    %1284 = vmatprep.subr.mxu0 0.0
    %1285 = vmatpush1.msra.mxu0 %v64
    %1286 = vmatprep.subr.mxu0 0.0
    %1287 = vmatpush1.msra.mxu0 %v67
    %1288 = vmatprep.subr.mxu0 0.0
    %1289 = vmatpush1.msra.mxu0 %v70
    %1290 = vmatprep.subr.mxu0 0.0
    %1291 = vmatpush1.msra.mxu0 %v73
    %1292 = vmatprep.subr.mxu0 0.0
    %1293 = vmatpush1.msra.mxu0 %v76
    %1294 = vmatprep.subr.mxu0 0.0
    %1295 = vmatpush1.msra.mxu0 %v79
    %1296 = vmatprep.subr.mxu0 0.0
    %1297 = vmatpush1.msra.mxu0 %v82
    %1298 = vmatprep.subr.mxu0 0.0
    %1299 = vmatpush1.msra.mxu0 %v85
    %1300 = vmatprep.subr.mxu0 0.0
    %1301 = vmatpush1.msra.mxu0 %v88
    %1302 = vmatprep.subr.mxu0 0.0
    %1303 = vmatpush1.msra.mxu0 %v91
    %1304 = vmatprep.subr.mxu0 0.0
    %1305 = vmatpush1.msra.mxu0 %v94
    %1306 = vmatprep.subr.mxu0 0.0
    %1307 = vmatpush1.msra.mxu0 %v97
    %1308 = vmatprep.subr.mxu0 0.0
    %1309 = vmatpush1.msra.mxu0 %v100
    %1310 = vmatprep.subr.mxu0 0.0
    %1311 = vmatpush1.msra.mxu0 %v103
    %1312 = vmatprep.subr.mxu0 0.0
    %1313 = vmatpush1.msra.mxu0 %v106
    %1314 = vmatprep.subr.mxu0 0.0
    %1315 = vmatpush1.msra.mxu0 0.0
    %1316 = vmatprep.subr.mxu0 0.0
    %1317 = vmatpush1.msra.mxu0 0.0
    %1318 = vmatprep.subr.mxu0 0.0
    %1319 = vmatpush1.msra.mxu0 0.0
    %1320 = vmatprep.subr.mxu0 0.0
    %1321 = vmatpush1.msra.mxu0 0.0
    %1322 = vmatprep.subr.mxu0 0.0
    %1323 = vmatpush1.msra.mxu0 0.0
    %1324 = vmatprep.subr.mxu0 0.0
    %1325 = vmatpush1.msra.mxu0 0.0
    %1326 = vmatprep.subr.mxu0 0.0
    %1327 = vmatpush1.msra.mxu0 0.0
    %1328 = vmatprep.subr.mxu0 0.0
    %1329 = vmatpush1.msra.mxu0 0.0
    %1330 = vmatprep.subr.mxu0 0.0
    %1331 = vmatpush1.msra.mxu0 0.0
    %1332 = vmatprep.subr.mxu0 0.0
    %1333 = vmatpush1.msra.mxu0 0.0
    %1334 = vmatprep.subr.mxu0 0.0
    %1335 = vmatpush1.msra.mxu0 0.0
    %1336 = vmatprep.subr.mxu0 0.0
    %1337 = vmatpush1.msra.mxu0 0.0
    %1338 = vmatprep.subr.mxu0 0.0
    %1339 = vmatpush1.msra.mxu0 0.0
    %1340 = vmatprep.subr.mxu0 0.0
    %1341 = vmatpush1.msra.mxu0 0.0
    %1342 = vmatprep.subr.mxu0 0.0
    %1343 = vmatpush1.msra.mxu0 0.0
    %1344 = vmatprep.subr.mxu0 0.0
    %1345 = vmatpush1.msra.mxu0 0.0
    %1346 = vmatprep.mubr.f32.mxu0 0.0
    %1347 = vmatmul.mubr.f32.gmra.mrb[0].mxu0 %v1203
    %v1348 = vpop.f32.mrb[0].mxu0
    %v1349 = vadd.f32 0.0, %v1348
    %v1350 = vpop.f32.mrb[0].mxu0
    %1351 = vmatprep.mubr.f32.mxu0 0.0
    %1352 = vmatmul.mubr.f32.gmra.mrb[0].mxu0 %v1204
    %v1353 = vpop.f32.mrb[0].mxu0
    %v1354 = vadd.f32 0.0, %v1353
    %v1355 = vpop.f32.mrb[0].mxu0
    %1356 = vdwg.mxu0
    %v1358 = vsel %vm285, %v1272, 0
    %v1361 = vsel %vm285, %v1278, 0
    %v1364 = vsel %vm285, %v1274, 0
    %v1367 = vsel %vm285, %v1280, 0
    %1369 = vmatprep.subr.mxu0 0.0
    %1370 = vmatpush1.xpose.msra.mxu0 %v1364
    %1371 = vmatprep.subr.mxu0 0.0
    %1372 = vmatpush1.xpose.msra.mxu0 %v1367
    %1373 = vmatprep.subr.mxu0 0.0
    %1374 = vmatpush1.xpose.msra.mxu0 0.0
    %1375 = vmatprep.subr.mxu0 0.0
    %1376 = vmatpush1.xpose.msra.mxu0 0.0
    %1377 = vmatprep.subr.mxu0 0.0
    %1378 = vmatpush1.xpose.msra.mxu0 0.0
    %1379 = vmatprep.subr.mxu0 0.0
    %1380 = vmatpush1.xpose.msra.mxu0 0.0
    %1381 = vmatprep.subr.mxu0 0.0
    %1382 = vmatpush1.xpose.msra.mxu0 0.0
    %1383 = vmatprep.subr.mxu0 0.0
    %1384 = vmatpush1.xpose.msra.mxu0 0.0
    %1385 = vmatprep.subr.mxu0 0.0
    %1386 = vmatpush1.xpose.msra.mxu0 0.0
    %1387 = vmatprep.subr.mxu0 0.0
    %1388 = vmatpush1.xpose.msra.mxu0 0.0
    %1389 = vmatprep.subr.mxu0 0.0
    %1390 = vmatpush1.xpose.msra.mxu0 0.0
    %1391 = vmatprep.subr.mxu0 0.0
    %1392 = vmatpush1.xpose.msra.mxu0 0.0
    %1393 = vmatprep.subr.mxu0 0.0
    %1394 = vmatpush1.xpose.msra.mxu0 0.0
    %1395 = vmatprep.subr.mxu0 0.0
    %1396 = vmatpush1.xpose.msra.mxu0 0.0
    %1397 = vmatprep.subr.mxu0 0.0
    %1398 = vmatpush1.xpose.msra.mxu0 0.0
    %1399 = vmatprep.subr.mxu0 0.0
    %1400 = vmatpush1.xpose.msra.mxu0 0.0
    %1401 = vmatprep.subr.mxu0 0.0
    %1402 = vmatpush1.xpose.msra.mxu0 0.0
    %1403 = vmatprep.subr.mxu0 0.0
    %1404 = vmatpush1.xpose.msra.mxu0 0.0
    %1405 = vmatprep.subr.mxu0 0.0
    %1406 = vmatpush1.xpose.msra.mxu0 0.0
    %1407 = vmatprep.subr.mxu0 0.0
    %1408 = vmatpush1.xpose.msra.mxu0 0.0
    %1409 = vmatprep.subr.mxu0 0.0
    %1410 = vmatpush1.xpose.msra.mxu0 0.0
    %1411 = vmatprep.subr.mxu0 0.0
    %1412 = vmatpush1.xpose.msra.mxu0 0.0
    %1413 = vmatprep.subr.mxu0 0.0
    %1414 = vmatpush1.xpose.msra.mxu0 0.0
    %1415 = vmatprep.subr.mxu0 0.0
    %1416 = vmatpush1.xpose.msra.mxu0 0.0
    %1417 = vmatprep.subr.mxu0 0.0
    %1418 = vmatpush1.xpose.msra.mxu0 0.0
    %1419 = vmatprep.subr.mxu0 0.0
    %1420 = vmatpush1.xpose.msra.mxu0 0.0
    %1421 = vmatprep.subr.mxu0 0.0
    %1422 = vmatpush1.xpose.msra.mxu0 0.0
    %1423 = vmatprep.subr.mxu0 0.0
    %1424 = vmatpush1.xpose.msra.mxu0 0.0
    %1425 = vmatprep.subr.mxu0 0.0
    %1426 = vmatpush1.xpose.msra.mxu0 0.0
    %1427 = vmatprep.subr.mxu0 0.0
    %1428 = vmatpush1.xpose.msra.mxu0 0.0
    %1429 = vmatprep.subr.mxu0 0.0
    %1430 = vmatpush1.xpose.msra.mxu0 0.0
    %1431 = vmatprep.subr.mxu0 0.0
    %1432 = vmatpush1.xpose.msra.mxu0 0.0
    %1433 = vmatprep.mubr.f32.mxu0 0.0
    %1434 = vmatmul.mubr.f32.gmra.mrb[0].mxu0 %v1358
    %v1435 = vpop.f32.mrb[0].mxu0
    %v1436 = vadd.f32 0.0, %v1435
    %v1437 = vpop.f32.mrb[0].mxu0
    %1438 = vmatprep.mubr.f32.mxu0 0.0
    %1439 = vmatmul.mubr.f32.gmra.mrb[0].mxu0 %v1361
    %v1440 = vpop.f32.mrb[0].mxu0
    %v1441 = vadd.f32 0.0, %v1440
    %v1442 = vpop.f32.mrb[0].mxu0
    %1443 = vdwg.mxu0
    %v1444 = vsel %vm129, %v1436, -inf
    %v1445 = vsel %vm130, %v1441, -inf
    %v1446 = vsel %vm375, %v1444, -inf
    %1447 = vmax.xlane.f32.xlu0 %v1446
    %v1448 = vpop.xlane.xlu0 %1447
    %v1449 = vsel %vm375, %v1445, -inf
    %1450 = vmax.xlane.f32.xlu0 %v1449
    %v1451 = vpop.xlane.xlu0 %1450
    %v1452 = vsub.f32 %v1444, %v1448
    %v1453 = vsub.f32 %v1445, %v1451
    %v1454 = vmul.f32 %v1452, 1.442695
    %v1455 = vpow.pop %v1454
    %v1456 = vmul.f32 %v1453, 1.442695
    %v1457 = vpow.pop %v1456
    %v1458 = vsel %vm375, %v1455, 0.0
    %1459 = vadd.xlane.f32.xlu0 %v1458
    %v1460 = vpop.xlane.xlu0 %1459
    %v1461 = vsel %vm375, %v1457, 0.0
    %1462 = vadd.xlane.f32.xlu0 %v1461
    %v1463 = vpop.xlane.xlu0 %1462
    %v1464 = vrcp.pop %v1460
    %v1465 = vrcp.pop %v1463
    %v1466 = vmul.f32 %v1455, %v1464
    %v1467 = vmul.f32 %v1457, %v1465
    %v1469 = vsel %vm375, %v1466, 0
    %v1472 = vsel %vm375, %v1467, 0
    %1474 = vmatprep.subr.mxu0 0.0
    %1475 = vmatpush1.msra.mxu0 %v1349
    %1476 = vmatprep.subr.mxu0 0.0
    %1477 = vmatpush1.msra.mxu0 %v1354
    %1478 = vmatprep.subr.mxu0 0.0
    %1479 = vmatpush1.msra.mxu0 0.0
    %1480 = vmatprep.subr.mxu0 0.0
    %1481 = vmatpush1.msra.mxu0 0.0
    %1482 = vmatprep.subr.mxu0 0.0
    %1483 = vmatpush1.msra.mxu0 0.0
    %1484 = vmatprep.subr.mxu0 0.0
    %1485 = vmatpush1.msra.mxu0 0.0
    %1486 = vmatprep.subr.mxu0 0.0
    %1487 = vmatpush1.msra.mxu0 0.0
    %1488 = vmatprep.subr.mxu0 0.0
    %1489 = vmatpush1.msra.mxu0 0.0
    %1490 = vmatprep.subr.mxu0 0.0
    %1491 = vmatpush1.msra.mxu0 0.0
    %1492 = vmatprep.subr.mxu0 0.0
    %1493 = vmatpush1.msra.mxu0 0.0
    %1494 = vmatprep.subr.mxu0 0.0
    %1495 = vmatpush1.msra.mxu0 0.0
    %1496 = vmatprep.subr.mxu0 0.0
    %1497 = vmatpush1.msra.mxu0 0.0
    %1498 = vmatprep.subr.mxu0 0.0
    %1499 = vmatpush1.msra.mxu0 0.0
    %1500 = vmatprep.subr.mxu0 0.0
    %1501 = vmatpush1.msra.mxu0 0.0
    %1502 = vmatprep.subr.mxu0 0.0
    %1503 = vmatpush1.msra.mxu0 0.0
    %1504 = vmatprep.subr.mxu0 0.0
    %1505 = vmatpush1.msra.mxu0 0.0
    %1506 = vmatprep.subr.mxu0 0.0
    %1507 = vmatpush1.msra.mxu0 0.0
    %1508 = vmatprep.subr.mxu0 0.0
    %1509 = vmatpush1.msra.mxu0 0.0
    %1510 = vmatprep.subr.mxu0 0.0
    %1511 = vmatpush1.msra.mxu0 0.0
    %1512 = vmatprep.subr.mxu0 0.0
    %1513 = vmatpush1.msra.mxu0 0.0
    %1514 = vmatprep.subr.mxu0 0.0
    %1515 = vmatpush1.msra.mxu0 0.0
    %1516 = vmatprep.subr.mxu0 0.0
    %1517 = vmatpush1.msra.mxu0 0.0
    %1518 = vmatprep.subr.mxu0 0.0
    %1519 = vmatpush1.msra.mxu0 0.0
    %1520 = vmatprep.subr.mxu0 0.0
    %1521 = vmatpush1.msra.mxu0 0.0
    %1522 = vmatprep.subr.mxu0 0.0
    %1523 = vmatpush1.msra.mxu0 0.0
    %1524 = vmatprep.subr.mxu0 0.0
    %1525 = vmatpush1.msra.mxu0 0.0
    %1526 = vmatprep.subr.mxu0 0.0
    %1527 = vmatpush1.msra.mxu0 0.0
    %1528 = vmatprep.subr.mxu0 0.0
    %1529 = vmatpush1.msra.mxu0 0.0
    %1530 = vmatprep.subr.mxu0 0.0
    %1531 = vmatpush1.msra.mxu0 0.0
    %1532 = vmatprep.subr.mxu0 0.0
    %1533 = vmatpush1.msra.mxu0 0.0
    %1534 = vmatprep.subr.mxu0 0.0
    %1535 = vmatpush1.msra.mxu0 0.0
    %1536 = vmatprep.subr.mxu0 0.0
    %1537 = vmatpush1.msra.mxu0 0.0
    %1538 = vmatprep.mubr.f32.mxu0 0.0
    %1539 = vmatmul.mubr.f32.gmra.mrb[0].mxu0 %v1469
    %v1540 = vpop.f32.mrb[0].mxu0
    %v1541 = vadd.f32 0.0, %v1540
    %v1542 = vpop.f32.mrb[0].mxu0
    %1543 = vmatprep.mubr.f32.mxu0 0.0
    %1544 = vmatmul.mubr.f32.gmra.mrb[0].mxu0 %v1472
    %v1545 = vpop.f32.mrb[0].mxu0
    %v1546 = vadd.f32 0.0, %v1545
    %v1547 = vpop.f32.mrb[0].mxu0
    %1548 = vdwg.mxu0
    %1549 = vrot.lane.b32.xlu0 %v1272, 96
    %v1550 = vpop.permute.xlu0 %1549
    %1551 = vrot.lane.b32.xlu0 %v1278, 96
    %v1552 = vpop.permute.xlu0 %1551
    %1553 = vrot.lane.b32.xlu0 %v1274, 96
    %v1554 = vpop.permute.xlu0 %1553
    %1555 = vrot.lane.b32.xlu0 %v1280, 96
    %v1556 = vpop.permute.xlu0 %1555
    %v1557 = vsel %vm285, %v1550, 0
    %v1559 = vsel %vm285, %v1552, 0
    %v1561 = vsel %vm285, %v1554, 0
    %v1563 = vsel %vm285, %v1556, 0
    %1565 = vmatprep.subr.mxu0 0.0
    %1566 = vmatpush1.xpose.msra.mxu0 %v1561
    %1567 = vmatprep.subr.mxu0 0.0
    %1568 = vmatpush1.xpose.msra.mxu0 %v1563
    %1569 = vmatprep.subr.mxu0 0.0
    %1570 = vmatpush1.xpose.msra.mxu0 0.0
    %1571 = vmatprep.subr.mxu0 0.0
    %1572 = vmatpush1.xpose.msra.mxu0 0.0
    %1573 = vmatprep.subr.mxu0 0.0
    %1574 = vmatpush1.xpose.msra.mxu0 0.0
    %1575 = vmatprep.subr.mxu0 0.0
    %1576 = vmatpush1.xpose.msra.mxu0 0.0
    %1577 = vmatprep.subr.mxu0 0.0
    %1578 = vmatpush1.xpose.msra.mxu0 0.0
    %1579 = vmatprep.subr.mxu0 0.0
    %1580 = vmatpush1.xpose.msra.mxu0 0.0
    %1581 = vmatprep.subr.mxu0 0.0
    %1582 = vmatpush1.xpose.msra.mxu0 0.0
    %1583 = vmatprep.subr.mxu0 0.0
    %1584 = vmatpush1.xpose.msra.mxu0 0.0
    %1585 = vmatprep.subr.mxu0 0.0
    %1586 = vmatpush1.xpose.msra.mxu0 0.0
    %1587 = vmatprep.subr.mxu0 0.0
    %1588 = vmatpush1.xpose.msra.mxu0 0.0
    %1589 = vmatprep.subr.mxu0 0.0
    %1590 = vmatpush1.xpose.msra.mxu0 0.0
    %1591 = vmatprep.subr.mxu0 0.0
    %1592 = vmatpush1.xpose.msra.mxu0 0.0
    %1593 = vmatprep.subr.mxu0 0.0
    %1594 = vmatpush1.xpose.msra.mxu0 0.0
    %1595 = vmatprep.subr.mxu0 0.0
    %1596 = vmatpush1.xpose.msra.mxu0 0.0
    %1597 = vmatprep.subr.mxu0 0.0
    %1598 = vmatpush1.xpose.msra.mxu0 0.0
    %1599 = vmatprep.subr.mxu0 0.0
    %1600 = vmatpush1.xpose.msra.mxu0 0.0
    %1601 = vmatprep.subr.mxu0 0.0
    %1602 = vmatpush1.xpose.msra.mxu0 0.0
    %1603 = vmatprep.subr.mxu0 0.0
    %1604 = vmatpush1.xpose.msra.mxu0 0.0
    %1605 = vmatprep.subr.mxu0 0.0
    %1606 = vmatpush1.xpose.msra.mxu0 0.0
    %1607 = vmatprep.subr.mxu0 0.0
    %1608 = vmatpush1.xpose.msra.mxu0 0.0
    %1609 = vmatprep.subr.mxu0 0.0
    %1610 = vmatpush1.xpose.msra.mxu0 0.0
    %1611 = vmatprep.subr.mxu0 0.0
    %1612 = vmatpush1.xpose.msra.mxu0 0.0
    %1613 = vmatprep.subr.mxu0 0.0
    %1614 = vmatpush1.xpose.msra.mxu0 0.0
    %1615 = vmatprep.subr.mxu0 0.0
    %1616 = vmatpush1.xpose.msra.mxu0 0.0
    %1617 = vmatprep.subr.mxu0 0.0
    %1618 = vmatpush1.xpose.msra.mxu0 0.0
    %1619 = vmatprep.subr.mxu0 0.0
    %1620 = vmatpush1.xpose.msra.mxu0 0.0
    %1621 = vmatprep.subr.mxu0 0.0
    %1622 = vmatpush1.xpose.msra.mxu0 0.0
    %1623 = vmatprep.subr.mxu0 0.0
    %1624 = vmatpush1.xpose.msra.mxu0 0.0
    %1625 = vmatprep.subr.mxu0 0.0
    %1626 = vmatpush1.xpose.msra.mxu0 0.0
    %1627 = vmatprep.subr.mxu0 0.0
    %1628 = vmatpush1.xpose.msra.mxu0 0.0
    %1629 = vmatprep.mubr.f32.mxu0 0.0
    %1630 = vmatmul.mubr.f32.gmra.mrb[0].mxu0 %v1557
    %v1631 = vpop.f32.mrb[0].mxu0
    %v1632 = vadd.f32 0.0, %v1631
    %v1633 = vpop.f32.mrb[0].mxu0
    %1634 = vmatprep.mubr.f32.mxu0 0.0
    %1635 = vmatmul.mubr.f32.gmra.mrb[0].mxu0 %v1559
    %v1636 = vpop.f32.mrb[0].mxu0
    %v1637 = vadd.f32 0.0, %v1636
    %v1638 = vpop.f32.mrb[0].mxu0
    %1639 = vdwg.mxu0
    %v1640 = vsel %vm129, %v1632, -inf
    %v1641 = vsel %vm130, %v1637, -inf
    %v1642 = vsel %vm375, %v1640, -inf
    %1643 = vmax.xlane.f32.xlu0 %v1642
    %v1644 = vpop.xlane.xlu0 %1643
    %v1645 = vsel %vm375, %v1641, -inf
    %1646 = vmax.xlane.f32.xlu0 %v1645
    %v1647 = vpop.xlane.xlu0 %1646
    %v1648 = vsub.f32 %v1640, %v1644
    %v1649 = vsub.f32 %v1641, %v1647
    %v1650 = vmul.f32 %v1648, 1.442695
    %v1651 = vpow.pop %v1650
    %v1652 = vmul.f32 %v1649, 1.442695
    %v1653 = vpow.pop %v1652
    %v1654 = vsel %vm375, %v1651, 0.0
    %1655 = vadd.xlane.f32.xlu0 %v1654
    %v1656 = vpop.xlane.xlu0 %1655
    %v1657 = vsel %vm375, %v1653, 0.0
    %1658 = vadd.xlane.f32.xlu0 %v1657
    %v1659 = vpop.xlane.xlu0 %1658
    %v1660 = vrcp.pop %v1656
    %v1661 = vrcp.pop %v1659
    %v1662 = vmul.f32 %v1651, %v1660
    %v1663 = vmul.f32 %v1653, %v1661
    %1666 = vrot.lane.b32.xlu0 %v1349, 96
    %v1667 = vpop.permute.xlu0 %1666
    %1668 = vrot.lane.b32.xlu0 %v1354, 96
    %v1669 = vpop.permute.xlu0 %1668
    %v1673 = vsel %vm375, %v1662, 0
    %v1676 = vsel %vm375, %v1663, 0
    %1678 = vmatprep.subr.mxu0 0.0
    %1679 = vmatpush1.msra.mxu0 %v1667
    %1680 = vmatprep.subr.mxu0 0.0
    %1681 = vmatpush1.msra.mxu0 %v1669
    %1682 = vmatprep.subr.mxu0 0.0
    %1683 = vmatpush1.msra.mxu0 0.0
    %1684 = vmatprep.subr.mxu0 0.0
    %1685 = vmatpush1.msra.mxu0 0.0
    %1686 = vmatprep.subr.mxu0 0.0
    %1687 = vmatpush1.msra.mxu0 0.0
    %1688 = vmatprep.subr.mxu0 0.0
    %1689 = vmatpush1.msra.mxu0 0.0
    %1690 = vmatprep.subr.mxu0 0.0
    %1691 = vmatpush1.msra.mxu0 0.0
    %1692 = vmatprep.subr.mxu0 0.0
    %1693 = vmatpush1.msra.mxu0 0.0
    %1694 = vmatprep.subr.mxu0 0.0
    %1695 = vmatpush1.msra.mxu0 0.0
    %1696 = vmatprep.subr.mxu0 0.0
    %1697 = vmatpush1.msra.mxu0 0.0
    %1698 = vmatprep.subr.mxu0 0.0
    %1699 = vmatpush1.msra.mxu0 0.0
    %1700 = vmatprep.subr.mxu0 0.0
    %1701 = vmatpush1.msra.mxu0 0.0
    %1702 = vmatprep.subr.mxu0 0.0
    %1703 = vmatpush1.msra.mxu0 0.0
    %1704 = vmatprep.subr.mxu0 0.0
    %1705 = vmatpush1.msra.mxu0 0.0
    %1706 = vmatprep.subr.mxu0 0.0
    %1707 = vmatpush1.msra.mxu0 0.0
    %1708 = vmatprep.subr.mxu0 0.0
    %1709 = vmatpush1.msra.mxu0 0.0
    %1710 = vmatprep.subr.mxu0 0.0
    %1711 = vmatpush1.msra.mxu0 0.0
    %1712 = vmatprep.subr.mxu0 0.0
    %1713 = vmatpush1.msra.mxu0 0.0
    %1714 = vmatprep.subr.mxu0 0.0
    %1715 = vmatpush1.msra.mxu0 0.0
    %1716 = vmatprep.subr.mxu0 0.0
    %1717 = vmatpush1.msra.mxu0 0.0
    %1718 = vmatprep.subr.mxu0 0.0
    %1719 = vmatpush1.msra.mxu0 0.0
    %1720 = vmatprep.subr.mxu0 0.0
    %1721 = vmatpush1.msra.mxu0 0.0
    %1722 = vmatprep.subr.mxu0 0.0
    %1723 = vmatpush1.msra.mxu0 0.0
    %1724 = vmatprep.subr.mxu0 0.0
    %1725 = vmatpush1.msra.mxu0 0.0
    %1726 = vmatprep.subr.mxu0 0.0
    %1727 = vmatpush1.msra.mxu0 0.0
    %1728 = vmatprep.subr.mxu0 0.0
    %1729 = vmatpush1.msra.mxu0 0.0
    %1730 = vmatprep.subr.mxu0 0.0
    %1731 = vmatpush1.msra.mxu0 0.0
    %1732 = vmatprep.subr.mxu0 0.0
    %1733 = vmatpush1.msra.mxu0 0.0
    %1734 = vmatprep.subr.mxu0 0.0
    %1735 = vmatpush1.msra.mxu0 0.0
    %1736 = vmatprep.subr.mxu0 0.0
    %1737 = vmatpush1.msra.mxu0 0.0
    %1738 = vmatprep.subr.mxu0 0.0
    %1739 = vmatpush1.msra.mxu0 0.0
    %1740 = vmatprep.subr.mxu0 0.0
    %1741 = vmatpush1.msra.mxu0 0.0
    %1742 = vmatprep.mubr.f32.mxu0 0.0
    %1743 = vmatmul.mubr.f32.gmra.mrb[0].mxu0 %v1673
    %v1744 = vpop.f32.mrb[0].mxu0
    %v1745 = vadd.f32 0.0, %v1744
    %v1746 = vpop.f32.mrb[0].mxu0
    %1747 = vmatprep.mubr.f32.mxu0 0.0
    %1748 = vmatmul.mubr.f32.gmra.mrb[0].mxu0 %v1676
    %v1749 = vpop.f32.mrb[0].mxu0
    %v1750 = vadd.f32 0.0, %v1749
    %v1751 = vpop.f32.mrb[0].mxu0
    %1752 = vdwg.mxu0
    %1753 = vrot.lane.b32.xlu0 %v1272, 64
    %v1754 = vpop.permute.xlu0 %1753
    %1755 = vrot.lane.b32.xlu0 %v1278, 64
    %v1756 = vpop.permute.xlu0 %1755
    %1757 = vrot.lane.b32.xlu0 %v1274, 64
    %v1758 = vpop.permute.xlu0 %1757
    %1759 = vrot.lane.b32.xlu0 %v1280, 64
    %v1760 = vpop.permute.xlu0 %1759
    %v1761 = vsel %vm285, %v1754, 0
    %v1763 = vsel %vm285, %v1756, 0
    %v1765 = vsel %vm285, %v1758, 0
    %v1767 = vsel %vm285, %v1760, 0
    %1769 = vmatprep.subr.mxu0 0.0
    %1770 = vmatpush1.xpose.msra.mxu0 %v1765
    %1771 = vmatprep.subr.mxu0 0.0
    %1772 = vmatpush1.xpose.msra.mxu0 %v1767
    %1773 = vmatprep.subr.mxu0 0.0
    %1774 = vmatpush1.xpose.msra.mxu0 0.0
    %1775 = vmatprep.subr.mxu0 0.0
    %1776 = vmatpush1.xpose.msra.mxu0 0.0
    %1777 = vmatprep.subr.mxu0 0.0
    %1778 = vmatpush1.xpose.msra.mxu0 0.0
    %1779 = vmatprep.subr.mxu0 0.0
    %1780 = vmatpush1.xpose.msra.mxu0 0.0
    %1781 = vmatprep.subr.mxu0 0.0
    %1782 = vmatpush1.xpose.msra.mxu0 0.0
    %1783 = vmatprep.subr.mxu0 0.0
    %1784 = vmatpush1.xpose.msra.mxu0 0.0
    %1785 = vmatprep.subr.mxu0 0.0
    %1786 = vmatpush1.xpose.msra.mxu0 0.0
    %1787 = vmatprep.subr.mxu0 0.0
    %1788 = vmatpush1.xpose.msra.mxu0 0.0
    %1789 = vmatprep.subr.mxu0 0.0
    %1790 = vmatpush1.xpose.msra.mxu0 0.0
    %1791 = vmatprep.subr.mxu0 0.0
    %1792 = vmatpush1.xpose.msra.mxu0 0.0
    %1793 = vmatprep.subr.mxu0 0.0
    %1794 = vmatpush1.xpose.msra.mxu0 0.0
    %1795 = vmatprep.subr.mxu0 0.0
    %1796 = vmatpush1.xpose.msra.mxu0 0.0
    %1797 = vmatprep.subr.mxu0 0.0
    %1798 = vmatpush1.xpose.msra.mxu0 0.0
    %1799 = vmatprep.subr.mxu0 0.0
    %1800 = vmatpush1.xpose.msra.mxu0 0.0
    %1801 = vmatprep.subr.mxu0 0.0
    %1802 = vmatpush1.xpose.msra.mxu0 0.0
    %1803 = vmatprep.subr.mxu0 0.0
    %1804 = vmatpush1.xpose.msra.mxu0 0.0
    %1805 = vmatprep.subr.mxu0 0.0
    %1806 = vmatpush1.xpose.msra.mxu0 0.0
    %1807 = vmatprep.subr.mxu0 0.0
    %1808 = vmatpush1.xpose.msra.mxu0 0.0
    %1809 = vmatprep.subr.mxu0 0.0
    %1810 = vmatpush1.xpose.msra.mxu0 0.0
    %1811 = vmatprep.subr.mxu0 0.0
    %1812 = vmatpush1.xpose.msra.mxu0 0.0
    %1813 = vmatprep.subr.mxu0 0.0
    %1814 = vmatpush1.xpose.msra.mxu0 0.0
    %1815 = vmatprep.subr.mxu0 0.0
    %1816 = vmatpush1.xpose.msra.mxu0 0.0
    %1817 = vmatprep.subr.mxu0 0.0
    %1818 = vmatpush1.xpose.msra.mxu0 0.0
    %1819 = vmatprep.subr.mxu0 0.0
    %1820 = vmatpush1.xpose.msra.mxu0 0.0
    %1821 = vmatprep.subr.mxu0 0.0
    %1822 = vmatpush1.xpose.msra.mxu0 0.0
    %1823 = vmatprep.subr.mxu0 0.0
    %1824 = vmatpush1.xpose.msra.mxu0 0.0
    %1825 = vmatprep.subr.mxu0 0.0
    %1826 = vmatpush1.xpose.msra.mxu0 0.0
    %1827 = vmatprep.subr.mxu0 0.0
    %1828 = vmatpush1.xpose.msra.mxu0 0.0
    %1829 = vmatprep.subr.mxu0 0.0
    %1830 = vmatpush1.xpose.msra.mxu0 0.0
    %1831 = vmatprep.subr.mxu0 0.0
    %1832 = vmatpush1.xpose.msra.mxu0 0.0
    %1833 = vmatprep.mubr.f32.mxu0 0.0
    %1834 = vmatmul.mubr.f32.gmra.mrb[0].mxu0 %v1761
    %v1835 = vpop.f32.mrb[0].mxu0
    %v1836 = vadd.f32 0.0, %v1835
    %v1837 = vpop.f32.mrb[0].mxu0
    %1838 = vmatprep.mubr.f32.mxu0 0.0
    %1839 = vmatmul.mubr.f32.gmra.mrb[0].mxu0 %v1763
    %v1840 = vpop.f32.mrb[0].mxu0
    %v1841 = vadd.f32 0.0, %v1840
    %v1842 = vpop.f32.mrb[0].mxu0
    %1843 = vdwg.mxu0
    %v1844 = vsel %vm129, %v1836, -inf
    %v1845 = vsel %vm130, %v1841, -inf
    %v1846 = vsel %vm375, %v1844, -inf
    %1847 = vmax.xlane.f32.xlu0 %v1846
    %v1848 = vpop.xlane.xlu0 %1847
    %v1849 = vsel %vm375, %v1845, -inf
    %1850 = vmax.xlane.f32.xlu0 %v1849
    %v1851 = vpop.xlane.xlu0 %1850
    %v1852 = vsub.f32 %v1844, %v1848
    %v1853 = vsub.f32 %v1845, %v1851
    %v1854 = vmul.f32 %v1852, 1.442695
    %v1855 = vpow.pop %v1854
    %v1856 = vmul.f32 %v1853, 1.442695
    %v1857 = vpow.pop %v1856
    %v1858 = vsel %vm375, %v1855, 0.0
    %1859 = vadd.xlane.f32.xlu0 %v1858
    %v1860 = vpop.xlane.xlu0 %1859
    %v1861 = vsel %vm375, %v1857, 0.0
    %1862 = vadd.xlane.f32.xlu0 %v1861
    %v1863 = vpop.xlane.xlu0 %1862
    %v1864 = vrcp.pop %v1860
    %v1865 = vrcp.pop %v1863
    %v1866 = vmul.f32 %v1855, %v1864
    %v1867 = vmul.f32 %v1857, %v1865
    %1868 = vrot.lane.b32.xlu0 %v1349, 64
    %v1869 = vpop.permute.xlu0 %1868
    %1870 = vrot.lane.b32.xlu0 %v1354, 64
    %v1871 = vpop.permute.xlu0 %1870
    %v1875 = vsel %vm375, %v1866, 0
    %v1878 = vsel %vm375, %v1867, 0
    %1880 = vmatprep.subr.mxu0 0.0
    %1881 = vmatpush1.msra.mxu0 %v1869
    %1882 = vmatprep.subr.mxu0 0.0
    %1883 = vmatpush1.msra.mxu0 %v1871
    %1884 = vmatprep.subr.mxu0 0.0
    %1885 = vmatpush1.msra.mxu0 0.0
    %1886 = vmatprep.subr.mxu0 0.0
    %1887 = vmatpush1.msra.mxu0 0.0
    %1888 = vmatprep.subr.mxu0 0.0
    %1889 = vmatpush1.msra.mxu0 0.0
    %1890 = vmatprep.subr.mxu0 0.0
    %1891 = vmatpush1.msra.mxu0 0.0
    %1892 = vmatprep.subr.mxu0 0.0
    %1893 = vmatpush1.msra.mxu0 0.0
    %1894 = vmatprep.subr.mxu0 0.0
    %1895 = vmatpush1.msra.mxu0 0.0
    %1896 = vmatprep.subr.mxu0 0.0
    %1897 = vmatpush1.msra.mxu0 0.0
    %1898 = vmatprep.subr.mxu0 0.0
    %1899 = vmatpush1.msra.mxu0 0.0
    %1900 = vmatprep.subr.mxu0 0.0
    %1901 = vmatpush1.msra.mxu0 0.0
    %1902 = vmatprep.subr.mxu0 0.0
    %1903 = vmatpush1.msra.mxu0 0.0
    %1904 = vmatprep.subr.mxu0 0.0
    %1905 = vmatpush1.msra.mxu0 0.0
    %1906 = vmatprep.subr.mxu0 0.0
    %1907 = vmatpush1.msra.mxu0 0.0
    %1908 = vmatprep.subr.mxu0 0.0
    %1909 = vmatpush1.msra.mxu0 0.0
    %1910 = vmatprep.subr.mxu0 0.0
    %1911 = vmatpush1.msra.mxu0 0.0
    %1912 = vmatprep.subr.mxu0 0.0
    %1913 = vmatpush1.msra.mxu0 0.0
    %1914 = vmatprep.subr.mxu0 0.0
    %1915 = vmatpush1.msra.mxu0 0.0
    %1916 = vmatprep.subr.mxu0 0.0
    %1917 = vmatpush1.msra.mxu0 0.0
    %1918 = vmatprep.subr.mxu0 0.0
    %1919 = vmatpush1.msra.mxu0 0.0
    %1920 = vmatprep.subr.mxu0 0.0
    %1921 = vmatpush1.msra.mxu0 0.0
    %1922 = vmatprep.subr.mxu0 0.0
    %1923 = vmatpush1.msra.mxu0 0.0
    %1924 = vmatprep.subr.mxu0 0.0
    %1925 = vmatpush1.msra.mxu0 0.0
    %1926 = vmatprep.subr.mxu0 0.0
    %1927 = vmatpush1.msra.mxu0 0.0
    %1928 = vmatprep.subr.mxu0 0.0
    %1929 = vmatpush1.msra.mxu0 0.0
    %1930 = vmatprep.subr.mxu0 0.0
    %1931 = vmatpush1.msra.mxu0 0.0
    %1932 = vmatprep.subr.mxu0 0.0
    %1933 = vmatpush1.msra.mxu0 0.0
    %1934 = vmatprep.subr.mxu0 0.0
    %1935 = vmatpush1.msra.mxu0 0.0
    %1936 = vmatprep.subr.mxu0 0.0
    %1937 = vmatpush1.msra.mxu0 0.0
    %1938 = vmatprep.subr.mxu0 0.0
    %1939 = vmatpush1.msra.mxu0 0.0
    %1940 = vmatprep.subr.mxu0 0.0
    %1941 = vmatpush1.msra.mxu0 0.0
    %1942 = vmatprep.subr.mxu0 0.0
    %1943 = vmatpush1.msra.mxu0 0.0
    %1944 = vmatprep.mubr.f32.mxu0 0.0
    %1945 = vmatmul.mubr.f32.gmra.mrb[0].mxu0 %v1875
    %v1946 = vpop.f32.mrb[0].mxu0
    %v1947 = vadd.f32 0.0, %v1946
    %v1948 = vpop.f32.mrb[0].mxu0
    %1949 = vmatprep.mubr.f32.mxu0 0.0
    %1950 = vmatmul.mubr.f32.gmra.mrb[0].mxu0 %v1878
    %v1951 = vpop.f32.mrb[0].mxu0
    %v1952 = vadd.f32 0.0, %v1951
    %v1953 = vpop.f32.mrb[0].mxu0
    %1954 = vdwg.mxu0
    %1955 = vrot.lane.b32.xlu0 %v1272, 32
    %v1956 = vpop.permute.xlu0 %1955
    %1957 = vrot.lane.b32.xlu0 %v1278, 32
    %v1958 = vpop.permute.xlu0 %1957
    %1959 = vrot.lane.b32.xlu0 %v1274, 32
    %v1960 = vpop.permute.xlu0 %1959
    %1961 = vrot.lane.b32.xlu0 %v1280, 32
    %v1962 = vpop.permute.xlu0 %1961
    %v1963 = vsel %vm285, %v1956, 0
    %v1965 = vsel %vm285, %v1958, 0
    %v1967 = vsel %vm285, %v1960, 0
    %v1969 = vsel %vm285, %v1962, 0
    %1971 = vmatprep.subr.mxu0 0.0
    %1972 = vmatpush1.xpose.msra.mxu0 %v1967
    %1973 = vmatprep.subr.mxu0 0.0
    %1974 = vmatpush1.xpose.msra.mxu0 %v1969
    %1975 = vmatprep.subr.mxu0 0.0
    %1976 = vmatpush1.xpose.msra.mxu0 0.0
    %1977 = vmatprep.subr.mxu0 0.0
    %1978 = vmatpush1.xpose.msra.mxu0 0.0
    %1979 = vmatprep.subr.mxu0 0.0
    %1980 = vmatpush1.xpose.msra.mxu0 0.0
    %1981 = vmatprep.subr.mxu0 0.0
    %1982 = vmatpush1.xpose.msra.mxu0 0.0
    %1983 = vmatprep.subr.mxu0 0.0
    %1984 = vmatpush1.xpose.msra.mxu0 0.0
    %1985 = vmatprep.subr.mxu0 0.0
    %1986 = vmatpush1.xpose.msra.mxu0 0.0
    %1987 = vmatprep.subr.mxu0 0.0
    %1988 = vmatpush1.xpose.msra.mxu0 0.0
    %1989 = vmatprep.subr.mxu0 0.0
    %1990 = vmatpush1.xpose.msra.mxu0 0.0
    %1991 = vmatprep.subr.mxu0 0.0
    %1992 = vmatpush1.xpose.msra.mxu0 0.0
    %1993 = vmatprep.subr.mxu0 0.0
    %1994 = vmatpush1.xpose.msra.mxu0 0.0
    %1995 = vmatprep.subr.mxu0 0.0
    %1996 = vmatpush1.xpose.msra.mxu0 0.0
    %1997 = vmatprep.subr.mxu0 0.0
    %1998 = vmatpush1.xpose.msra.mxu0 0.0
    %1999 = vmatprep.subr.mxu0 0.0
    %2000 = vmatpush1.xpose.msra.mxu0 0.0
    %2001 = vmatprep.subr.mxu0 0.0
    %2002 = vmatpush1.xpose.msra.mxu0 0.0
    %2003 = vmatprep.subr.mxu0 0.0
    %2004 = vmatpush1.xpose.msra.mxu0 0.0
    %2005 = vmatprep.subr.mxu0 0.0
    %2006 = vmatpush1.xpose.msra.mxu0 0.0
    %2007 = vmatprep.subr.mxu0 0.0
    %2008 = vmatpush1.xpose.msra.mxu0 0.0
    %2009 = vmatprep.subr.mxu0 0.0
    %2010 = vmatpush1.xpose.msra.mxu0 0.0
    %2011 = vmatprep.subr.mxu0 0.0
    %2012 = vmatpush1.xpose.msra.mxu0 0.0
    %2013 = vmatprep.subr.mxu0 0.0
    %2014 = vmatpush1.xpose.msra.mxu0 0.0
    %2015 = vmatprep.subr.mxu0 0.0
    %2016 = vmatpush1.xpose.msra.mxu0 0.0
    %2017 = vmatprep.subr.mxu0 0.0
    %2018 = vmatpush1.xpose.msra.mxu0 0.0
    %2019 = vmatprep.subr.mxu0 0.0
    %2020 = vmatpush1.xpose.msra.mxu0 0.0
    %2021 = vmatprep.subr.mxu0 0.0
    %2022 = vmatpush1.xpose.msra.mxu0 0.0
    %2023 = vmatprep.subr.mxu0 0.0
    %2024 = vmatpush1.xpose.msra.mxu0 0.0
    %2025 = vmatprep.subr.mxu0 0.0
    %2026 = vmatpush1.xpose.msra.mxu0 0.0
    %2027 = vmatprep.subr.mxu0 0.0
    %2028 = vmatpush1.xpose.msra.mxu0 0.0
    %2029 = vmatprep.subr.mxu0 0.0
    %2030 = vmatpush1.xpose.msra.mxu0 0.0
    %2031 = vmatprep.subr.mxu0 0.0
    %2032 = vmatpush1.xpose.msra.mxu0 0.0
    %2033 = vmatprep.subr.mxu0 0.0
    %2034 = vmatpush1.xpose.msra.mxu0 0.0
    %2035 = vmatprep.mubr.f32.mxu0 0.0
    %2036 = vmatmul.mubr.f32.gmra.mrb[0].mxu0 %v1963
    %v2037 = vpop.f32.mrb[0].mxu0
    %v2038 = vadd.f32 0.0, %v2037
    %v2039 = vpop.f32.mrb[0].mxu0
    %2040 = vmatprep.mubr.f32.mxu0 0.0
    %2041 = vmatmul.mubr.f32.gmra.mrb[0].mxu0 %v1965
    %v2042 = vpop.f32.mrb[0].mxu0
    %v2043 = vadd.f32 0.0, %v2042
    %v2044 = vpop.f32.mrb[0].mxu0
    %2045 = vdwg.mxu0
    %v2046 = vsel %vm129, %v2038, -inf
    %v2047 = vsel %vm130, %v2043, -inf
    %v2048 = vsel %vm375, %v2046, -inf
    %2049 = vmax.xlane.f32.xlu0 %v2048
    %v2050 = vpop.xlane.xlu0 %2049
    %v2051 = vsel %vm375, %v2047, -inf
    %2052 = vmax.xlane.f32.xlu0 %v2051
    %v2053 = vpop.xlane.xlu0 %2052
    %v2054 = vsub.f32 %v2046, %v2050
    %v2055 = vsub.f32 %v2047, %v2053
    %v2056 = vmul.f32 %v2054, 1.442695
    %v2057 = vpow.pop %v2056
    %v2058 = vmul.f32 %v2055, 1.442695
    %v2059 = vpow.pop %v2058
    %v2060 = vsel %vm375, %v2057, 0.0
    %2061 = vadd.xlane.f32.xlu0 %v2060
    %v2062 = vpop.xlane.xlu0 %2061
    %v2063 = vsel %vm375, %v2059, 0.0
    %2064 = vadd.xlane.f32.xlu0 %v2063
    %v2065 = vpop.xlane.xlu0 %2064
    %v2066 = vrcp.pop %v2062
    %v2067 = vrcp.pop %v2065
    %v2068 = vmul.f32 %v2057, %v2066
    %v2069 = vmul.f32 %v2059, %v2067
    %2070 = vrot.lane.b32.xlu0 %v1349, 32
    %v2071 = vpop.permute.xlu0 %2070
    %2072 = vrot.lane.b32.xlu0 %v1354, 32
    %v2073 = vpop.permute.xlu0 %2072
    %v2077 = vsel %vm375, %v2068, 0
    %v2080 = vsel %vm375, %v2069, 0
    %2082 = vmatprep.subr.mxu0 0.0
    %2083 = vmatpush1.msra.mxu0 %v2071
    %2084 = vmatprep.subr.mxu0 0.0
    %2085 = vmatpush1.msra.mxu0 %v2073
    %2086 = vmatprep.subr.mxu0 0.0
    %2087 = vmatpush1.msra.mxu0 0.0
    %2088 = vmatprep.subr.mxu0 0.0
    %2089 = vmatpush1.msra.mxu0 0.0
    %2090 = vmatprep.subr.mxu0 0.0
    %2091 = vmatpush1.msra.mxu0 0.0
    %2092 = vmatprep.subr.mxu0 0.0
    %2093 = vmatpush1.msra.mxu0 0.0
    %2094 = vmatprep.subr.mxu0 0.0
    %2095 = vmatpush1.msra.mxu0 0.0
    %2096 = vmatprep.subr.mxu0 0.0
    %2097 = vmatpush1.msra.mxu0 0.0
    %2098 = vmatprep.subr.mxu0 0.0
    %2099 = vmatpush1.msra.mxu0 0.0
    %2100 = vmatprep.subr.mxu0 0.0
    %2101 = vmatpush1.msra.mxu0 0.0
    %2102 = vmatprep.subr.mxu0 0.0
    %2103 = vmatpush1.msra.mxu0 0.0
    %2104 = vmatprep.subr.mxu0 0.0
    %2105 = vmatpush1.msra.mxu0 0.0
    %2106 = vmatprep.subr.mxu0 0.0
    %2107 = vmatpush1.msra.mxu0 0.0
    %2108 = vmatprep.subr.mxu0 0.0
    %2109 = vmatpush1.msra.mxu0 0.0
    %2110 = vmatprep.subr.mxu0 0.0
    %2111 = vmatpush1.msra.mxu0 0.0
    %2112 = vmatprep.subr.mxu0 0.0
    %2113 = vmatpush1.msra.mxu0 0.0
    %2114 = vmatprep.subr.mxu0 0.0
    %2115 = vmatpush1.msra.mxu0 0.0
    %2116 = vmatprep.subr.mxu0 0.0
    %2117 = vmatpush1.msra.mxu0 0.0
    %2118 = vmatprep.subr.mxu0 0.0
    %2119 = vmatpush1.msra.mxu0 0.0
    %2120 = vmatprep.subr.mxu0 0.0
    %2121 = vmatpush1.msra.mxu0 0.0
    %2122 = vmatprep.subr.mxu0 0.0
    %2123 = vmatpush1.msra.mxu0 0.0
    %2124 = vmatprep.subr.mxu0 0.0
    %2125 = vmatpush1.msra.mxu0 0.0
    %2126 = vmatprep.subr.mxu0 0.0
    %2127 = vmatpush1.msra.mxu0 0.0
    %2128 = vmatprep.subr.mxu0 0.0
    %2129 = vmatpush1.msra.mxu0 0.0
    %2130 = vmatprep.subr.mxu0 0.0
    %2131 = vmatpush1.msra.mxu0 0.0
    %2132 = vmatprep.subr.mxu0 0.0
    %2133 = vmatpush1.msra.mxu0 0.0
    %2134 = vmatprep.subr.mxu0 0.0
    %2135 = vmatpush1.msra.mxu0 0.0
    %2136 = vmatprep.subr.mxu0 0.0
    %2137 = vmatpush1.msra.mxu0 0.0
    %2138 = vmatprep.subr.mxu0 0.0
    %2139 = vmatpush1.msra.mxu0 0.0
    %2140 = vmatprep.subr.mxu0 0.0
    %2141 = vmatpush1.msra.mxu0 0.0
    %2142 = vmatprep.subr.mxu0 0.0
    %2143 = vmatpush1.msra.mxu0 0.0
    %2144 = vmatprep.subr.mxu0 0.0
    %2145 = vmatpush1.msra.mxu0 0.0
    %2146 = vmatprep.mubr.f32.mxu0 0.0
    %2147 = vmatmul.mubr.f32.gmra.mrb[0].mxu0 %v2077
    %v2148 = vpop.f32.mrb[0].mxu0
    %v2149 = vadd.f32 0.0, %v2148
    %v2150 = vpop.f32.mrb[0].mxu0
    %2151 = vmatprep.mubr.f32.mxu0 0.0
    %2152 = vmatmul.mubr.f32.gmra.mrb[0].mxu0 %v2080
    %v2153 = vpop.f32.mrb[0].mxu0
    %v2154 = vadd.f32 0.0, %v2153
    %v2155 = vpop.f32.mrb[0].mxu0
    %2156 = vdwg.mxu0
    %2159 = vrot.lane.b32.xlu0 %v1745, 32
    %v2160 = vpop.permute.xlu0 %2159
    %2161 = vrot.lane.b32.xlu0 %v1750, 32
    %v2162 = vpop.permute.xlu0 %2161
    %2167 = vrot.lane.b32.xlu0 %v1947, 64
    %v2168 = vpop.permute.xlu0 %2167
    %2169 = vrot.lane.b32.xlu0 %v1952, 64
    %v2170 = vpop.permute.xlu0 %2169
    %2175 = vrot.lane.b32.xlu0 %v2149, 96
    %v2176 = vpop.permute.xlu0 %2175
    %2177 = vrot.lane.b32.xlu0 %v2154, 96
    %v2178 = vpop.permute.xlu0 %2177
    %v2181 = vsel %vm285, %v1541, %v2160
    %v2182 = vsel %vm285, %v1546, %v2162
    %v2183 = vsel %vm1113, %v2181, %v2168
    %v2184 = vsel %vm1113, %v2182, %v2170
    %v2185 = vsel %vm1116, %v2183, %v2176
    %v2186 = vsel %vm1116, %v2184, %v2178
    %2187 = vmatprep.subr.mxu0 0.0
    %2188 = vmatpush1.msra.mxu0 %v107
    %2189 = vmatprep.subr.mxu0 0.0
    %2190 = vmatpush1.msra.mxu0 %v108
    %2191 = vmatprep.subr.mxu0 0.0
    %2192 = vmatpush1.msra.mxu0 %v109
    %2193 = vmatprep.subr.mxu0 0.0
    %2194 = vmatpush1.msra.mxu0 %v110
    %2195 = vmatprep.subr.mxu0 0.0
    %2196 = vmatpush1.msra.mxu0 %v111
    %2197 = vmatprep.subr.mxu0 0.0
    %2198 = vmatpush1.msra.mxu0 %v112
    %2199 = vmatprep.subr.mxu0 0.0
    %2200 = vmatpush1.msra.mxu0 %v113
    %2201 = vmatprep.subr.mxu0 0.0
    %2202 = vmatpush1.msra.mxu0 %v114
    %2203 = vmatprep.subr.mxu0 0.0
    %2204 = vmatpush1.msra.mxu0 %v115
    %2205 = vmatprep.subr.mxu0 0.0
    %2206 = vmatpush1.msra.mxu0 %v116
    %2207 = vmatprep.subr.mxu0 0.0
    %2208 = vmatpush1.msra.mxu0 %v117
    %2209 = vmatprep.subr.mxu0 0.0
    %2210 = vmatpush1.msra.mxu0 %v118
    %2211 = vmatprep.subr.mxu0 0.0
    %2212 = vmatpush1.msra.mxu0 %v119
    %2213 = vmatprep.subr.mxu0 0.0
    %2214 = vmatpush1.msra.mxu0 %v120
    %2215 = vmatprep.subr.mxu0 0.0
    %2216 = vmatpush1.msra.mxu0 %v121
    %2217 = vmatprep.subr.mxu0 0.0
    %2218 = vmatpush1.msra.mxu0 %v122
    %2219 = vmatprep.subr.mxu0 0.0
    %2220 = vmatpush1.msra.mxu0 0.0
    %2221 = vmatprep.subr.mxu0 0.0
    %2222 = vmatpush1.msra.mxu0 0.0
    %2223 = vmatprep.subr.mxu0 0.0
    %2224 = vmatpush1.msra.mxu0 0.0
    %2225 = vmatprep.subr.mxu0 0.0
    %2226 = vmatpush1.msra.mxu0 0.0
    %2227 = vmatprep.subr.mxu0 0.0
    %2228 = vmatpush1.msra.mxu0 0.0
    %2229 = vmatprep.subr.mxu0 0.0
    %2230 = vmatpush1.msra.mxu0 0.0
    %2231 = vmatprep.subr.mxu0 0.0
    %2232 = vmatpush1.msra.mxu0 0.0
    %2233 = vmatprep.subr.mxu0 0.0
    %2234 = vmatpush1.msra.mxu0 0.0
    %2235 = vmatprep.subr.mxu0 0.0
    %2236 = vmatpush1.msra.mxu0 0.0
    %2237 = vmatprep.subr.mxu0 0.0
    %2238 = vmatpush1.msra.mxu0 0.0
    %2239 = vmatprep.subr.mxu0 0.0
    %2240 = vmatpush1.msra.mxu0 0.0
    %2241 = vmatprep.subr.mxu0 0.0
    %2242 = vmatpush1.msra.mxu0 0.0
    %2243 = vmatprep.subr.mxu0 0.0
    %2244 = vmatpush1.msra.mxu0 0.0
    %2245 = vmatprep.subr.mxu0 0.0
    %2246 = vmatpush1.msra.mxu0 0.0
    %2247 = vmatprep.subr.mxu0 0.0
    %2248 = vmatpush1.msra.mxu0 0.0
    %2249 = vmatprep.subr.mxu0 0.0
    %2250 = vmatpush1.msra.mxu0 0.0
    %2251 = vmatprep.mubr.f32.mxu0 0.0
    %2252 = vmatmul.mubr.f32.gmra.mrb[0].mxu0 %v2185
    %v2253 = vpop.f32.mrb[0].mxu0
    %v2254 = vadd.f32 %v1123, %v2253
    %v2255 = vpop.f32.mrb[0].mxu0
    %2256 = vmatprep.mubr.f32.mxu0 0.0
    %2257 = vmatmul.mubr.f32.gmra.mrb[0].mxu0 %v2186
    %v2258 = vpop.f32.mrb[0].mxu0
    %v2259 = vadd.f32 %v1123, %v2258
    %v2260 = vpop.f32.mrb[0].mxu0
    %2261 = vdwg.mxu0
    %s2262 = scalar_lea.vmem [#allocation8], 16
    %2263 = vst [vmem:[%s2262] sm:$0xff] %v2254
    %2264 = vst [vmem:[%s2262 + $0x8] sm:$0xff] %v2259
    // Predicated region
    $region30: #{tpu_custom_call.1} parent=1 // pred_check
      _
    $region31: #{tpu_custom_call.1} parent=1 // pred_check_branch
      %2266 = sbr.rel (0) target = $region33
    $region32: #{tpu_custom_call.1} parent=1 // pred_region
      %s2268 = ssub.s32 512, 512
      %2269 = vsyncadd [#allocation4], %s2268
      %s2270 = sshll.u32 [#allocation8], 4
      %s2271 = int_to_ptr.vmem [resolvable:$true] %s2270
      %2276 = dma.vmem_to_hbm [thread:$0]  %s2271, 512, %s4, [#allocation4], 128, 128, 8
    $region33: #{tpu_custom_call.1} parent=1 // pred_fallthru
      _
    // Predicated region
    $region34: #{tpu_custom_call.1} parent=1 // pred_check
      _
    $region35: #{tpu_custom_call.1} parent=1 // pred_check_branch
      %2278 = sbr.rel (0) target = $region37
    $region36: #{tpu_custom_call.1} parent=1 // pred_region
      %2279 = dma.done [#allocation4], 512
    $region37: #{tpu_custom_call.1} parent=1 // pred_fallthru
      _
    %2280 = vsyncpa [#allocation3], 1
    %2281 = vsyncpa [#allocation6], 1
    %2282 = vsyncpa [#allocation4], 1

</llo_original>
